<compile_context>
chip_gen: v5e
topology: v5e:2x2
jax: 0.10.0
libtpu: 0.0.40
codegen_flags: <defaults>
</compile_context>

<pallas_src>
import functools

import jax
import jax.numpy as jnp
from jax import lax
from jax.experimental import pallas as pl
from jax.experimental.pallas import tpu as pltpu


_INT32_MAX = jnp.iinfo(jnp.int32).max
_LANE = 128


def _cdiv(a, b):
    return (a + b - 1) // b


def _round_up(a, b):
    return _cdiv(a, b) * b


def _fused_topk(tile, col, carry_v, carry_i, *, k, farthest):
    """Top-k over (carried-best region  U  chunk region), fused in one pass set.

    tile:    (m, n) f32  squared distances of this chunk (sentinel-masked).
    col:     (1, n) i32  global column ids of this chunk.
    carry_v: (m, K) f32  running best values (sentinel for unused slots).
    carry_i: (m, K) i32  running best global ids.

    Returns (vals (m, k), ids (m, k)), sorted ascending (nearest) / descending
    (farthest); ties broken by smallest global id (matches lax.top_k).
    """
    if farthest:
        sentinel = jnp.float32(-jnp.inf)
        reduce_best = functools.partial(jnp.max, axis=-1, keepdims=True)
        pick = jnp.maximum
    else:
        sentinel = jnp.float32(jnp.inf)
        reduce_best = functools.partial(jnp.min, axis=-1, keepdims=True)
        pick = jnp.minimum

    vals, idxs = [], []
    for j in range(k):
        best_t = reduce_best(tile)                     # (m, 1) full-width pass
        best_c = reduce_best(carry_v)                  # (m, 1) tiny (K lanes)
        best = pick(best_t, best_c)
        cid_t = jnp.min(jnp.where(tile == best, col, _INT32_MAX),
                        axis=-1, keepdims=True)
        cid_c = jnp.min(jnp.where(carry_v == best, carry_i, _INT32_MAX),
                        axis=-1, keepdims=True)
        bidx = jnp.minimum(cid_t, cid_c)
        vals.append(best)
        idxs.append(bidx)
        if j + 1 < k:   # the final knockout would be dead work -> skip it
            tile = jnp.where(col == bidx, sentinel, tile)
            carry_v = jnp.where(carry_i == bidx, sentinel, carry_v)
    return jnp.concatenate(vals, axis=-1), jnp.concatenate(idxs, axis=-1)


def _knn_kernel(q_ref, s_ref, dist_ref, idx_ref, best_v, best_i, *,
                k, n_total, n_chunk, chunks_per_block, n_block,
                farthest, use_mxu):
    # q_ref: (1, m_tile, C); s_ref: (1, C, n_block) lane-dense support block.
    n_step = pl.program_id(2)
    sentinel = jnp.float32(-jnp.inf) if farthest else jnp.float32(jnp.inf)

    # Reset the running top-k at the first support block of this (b, m) tile.
    @pl.when(n_step == 0)
    def _():
        best_v[...] = jnp.full(best_v.shape, sentinel, jnp.float32)
        best_i[...] = jnp.full(best_i.shape, n_total, jnp.int32)

    q = q_ref[0].astype(jnp.float32)               # (m_tile, C)
    m_tile, c_dim = q.shape
    if use_mxu:
        q2 = jnp.sum(q * q, axis=-1, keepdims=True)   # hoisted out of the loop

    base = n_step * n_block                        # global col offset of block

    def process_chunk(ci, carry):
        off = ci * n_chunk
        if not isinstance(off, int):
            off = pl.multiple_of(off, _LANE)
        st = s_ref[0, :, pl.ds(off, n_chunk)].astype(jnp.float32)  # (C, n_chunk)

        # ---- pairwise SQUARED distances (selection happens on d^2) ---------
        if use_mxu:
            s2 = jnp.sum(st * st, axis=0, keepdims=True)
            qs = jnp.dot(q, st, preferred_element_type=jnp.float32)
            d2 = jnp.maximum(q2 + s2 - 2.0 * qs, 0.0)
        else:
            # Tiny C (point clouds): exact VPU expansion, no cancellation.
            d2 = jnp.zeros((m_tile, n_chunk), jnp.float32)
            for c in range(c_dim):
                diff = q[:, c:c + 1] - st[c:c + 1, :]
                d2 = d2 + diff * diff

        # Global column ids; mask padded / out-of-range columns.
        col = base + off + lax.broadcasted_iota(jnp.int32, (1, n_chunk), 1)
        tile = jnp.where(col < n_total, d2, sentinel)

        # Fused merge: the carried best is just a tiny extra candidate region.
        new_v, new_i = _fused_topk(tile, col, best_v[...], best_i[...],
                                   k=k, farthest=farthest)
        best_v[...] = new_v
        best_i[...] = new_i
        return carry

    if chunks_per_block == 1:
        process_chunk(0, 0)
    else:
        lax.fori_loop(0, chunks_per_block, process_chunk, 0)

    # Finalize: sqrt only the selected (m_tile, K) values.
    # NOTE: rows of a partial (edge) m-tile compute on unspecified VMEM; this is
    # safe because every op above is row-independent and Pallas discards the
    # out-of-range rows of the output block.
    @pl.when(n_step == pl.num_programs(2) - 1)
    def _():
        dist_ref[0] = jnp.sqrt(best_v[...]).astype(dist_ref.dtype)
        idx_ref[0] = best_i[...]


def knn(query, support=None, *, neighbors, farthest=False,
        m_tile=None, n_chunk=None, chunks_per_block=None, use_mxu=None):
    """Pallas KNN. Returns (distances [B,M,K] f32, indices [B,M,K] i32)."""
    if support is None:
        support = query
    B, M, C = query.shape
    Bs, N, Cs = support.shape
    assert B == Bs and C == Cs, "query/support batch or channel mismatch"
    K = int(neighbors)
    if K > N:
        raise ValueError(f"neighbors ({K}) > number of support points ({N})")

    # ---- m tiling (parallel axis) ------------------------------------------
    if m_tile is None:
        m_tile = 128
    m_tile = min(m_tile, M)
    if m_tile < M:
        m_tile = min(M, _round_up(m_tile, 8))
    # v7x: make sure the parallel axes provide >= 2 work units (2 TensorCores).
    if B * _cdiv(M, m_tile) < 2 and M > 8:
        m_tile = _round_up(_cdiv(M, 2), 8)

    # ---- support chunking / super-blocks ------------------------------------
    if n_chunk is None:
        n_chunk = 2048
    n_chunk = max(_LANE, min(_round_up(n_chunk, _LANE), _round_up(N, _LANE)))
    n_pad = _round_up(N, n_chunk)
    n_chunks_total = n_pad // n_chunk
    if chunks_per_block is None:
        # Keep the (double-buffered) support block within a small VMEM budget;
        # typical point clouds become fully VMEM-resident (single super-block).
        budget = 4 * 1024 * 1024
        chunks_per_block = max(1, budget // (C * 4 * n_chunk))
    chunks_per_block = max(1, min(int(chunks_per_block), n_chunks_total))
    n_block = n_chunk * chunks_per_block
    n_super = _cdiv(n_pad, n_block)

    if use_mxu is None:
        use_mxu = C > 8      # exact VPU distance path by default for small C

    # Lane-dense, chunk-padded support layout (free XLA plumbing).
    support_t = jnp.swapaxes(support, 1, 2)                   # (B, C, N)
    if n_pad != N:
        support_t = jnp.pad(support_t, ((0, 0), (0, 0), (0, n_pad - N)))

    grid = (B, _cdiv(M, m_tile), n_super)
    kernel = functools.partial(
        _knn_kernel, k=K, n_total=N, n_chunk=n_chunk,
        chunks_per_block=chunks_per_block, n_block=n_block,
        farthest=farthest, use_mxu=use_mxu)

    # VMEM limit derived from the actual footprint: double-buffered IO blocks +
    # (m_tile, n_chunk) work intermediates + scratch, with ~2x headroom; stays
    # well below v7x's 64 MiB per-TensorCore budget.
    io_bytes = (C * n_block + m_tile * C + 2 * m_tile * K) * 4
    work_bytes = m_tile * n_chunk * 4
    est = 2 * io_bytes + 8 * work_bytes + 2 * m_tile * _LANE * 4
    vmem_limit = int(min(max(2 * est, 16 * 1024 * 1024), 40 * 1024 * 1024))

    return pl.pallas_call(
        kernel,
        out_shape=(
            jax.ShapeDtypeStruct((B, M, K), jnp.float32),
            jax.ShapeDtypeStruct((B, M, K), jnp.int32),
        ),
        grid_spec=pltpu.PrefetchScalarGridSpec(
            num_scalar_prefetch=0,
            grid=grid,
            in_specs=[
                pl.BlockSpec((1, m_tile, C), lambda b, m, n: (b, m, 0)),
                pl.BlockSpec((1, C, n_block), lambda b, m, n: (b, 0, n)),
            ],
            out_specs=[
                pl.BlockSpec((1, m_tile, K), lambda b, m, n: (b, m, 0)),
                pl.BlockSpec((1, m_tile, K), lambda b, m, n: (b, m, 0)),
            ],
            scratch_shapes=[
                pltpu.VMEM((m_tile, K), jnp.float32),   # running best d^2
                pltpu.VMEM((m_tile, K), jnp.int32),     # running best ids
            ],
        ),
        compiler_params=pltpu.CompilerParams(
            dimension_semantics=("parallel", "parallel", "arbitrary"),
            vmem_limit_bytes=vmem_limit,
        ),
    )(query, support_t)


def _knn_ref(query, support, neighbors, farthest=False):
    # Pure-JAX reference (exact cdist + topk(largest=farthest, sorted=True)).
    diff = query[:, :, None, :] - support[:, None, :, :]
    dist = jnp.sqrt(jnp.sum(diff * diff, axis=-1))
    vals, idx = lax.top_k(dist if farthest else -dist, neighbors)
    return (vals if farthest else -vals), idx.astype(jnp.int32)


if __name__ == "__main__":
    key = jax.random.PRNGKey(0)
    kq, ks, kq2, ks2, kq3, ks3 = jax.random.split(key, 6)

    # --- case A: tiny shapes, defaults (single chunk, resident support) -----
    B, M, N, C, K = 2, 16, 24, 4, 8
    query = jax.random.normal(kq, (B, M, C), dtype=jnp.float32)
    support = jax.random.normal(ks, (B, N, C), dtype=jnp.float32)

    d, i = knn(query, support, neighbors=K, farthest=False)
    jax.block_until_ready((d, i))
    d_ref, i_ref = _knn_ref(query, support, K, farthest=False)
    assert d.shape == (B, M, K) and i.shape == (B, M, K)
    assert i.dtype == jnp.int32
    assert jnp.allclose(d, d_ref, atol=1e-5), "distance mismatch (A nearest)"
    assert jnp.array_equal(i, i_ref), "index mismatch (A nearest)"

    df, i_f = knn(query, neighbors=K, farthest=True)        # self-support path
    jax.block_until_ready((df, i_f))
    df_ref, if_ref = _knn_ref(query, query, K, farthest=True)
    assert jnp.allclose(df, df_ref, atol=1e-5), "distance mismatch (A farthest)"
    assert jnp.array_equal(i_f, if_ref), "index mismatch (A farthest)"

    # --- case B: partial m-tiles + multi-super-block streaming path ---------
    B2, M2, N2, C2, K2 = 2, 40, 300, 3, 10
    q2 = jax.random.normal(kq2, (B2, M2, C2), dtype=jnp.float32)
    s2 = jax.random.normal(ks2, (B2, N2, C2), dtype=jnp.float32)
    db, ib = knn(q2, s2, neighbors=K2, farthest=False,
                 m_tile=16, n_chunk=128, chunks_per_block=1)
    jax.block_until_ready((db, ib))
    db_ref, ib_ref = _knn_ref(q2, s2, K2, farthest=False)
    assert jnp.allclose(db, db_ref, atol=1e-5), "distance mismatch (B)"
    assert jnp.array_equal(ib, ib_ref), "index mismatch (B)"

    # --- case C: same data, resident support + in-kernel chunk loop ---------
    dc, ic = knn(q2, s2, neighbors=K2, farthest=True, m_tile=16, n_chunk=128)
    jax.block_until_ready((dc, ic))
    dc_ref, ic_ref = _knn_ref(q2, s2, K2, farthest=True)
    assert jnp.allclose(dc, dc_ref, atol=1e-5), "distance mismatch (C)"
    assert jnp.array_equal(ic, ic_ref), "index mismatch (C)"

    # --- case D: larger C exercises the MXU distance path -------------------
    B4, M4, N4, C4, K4 = 2, 16, 64, 16, 5
    q4 = jax.random.normal(kq3, (B4, M4, C4), dtype=jnp.float32)
    s4 = jax.random.normal(ks3, (B4, N4, C4), dtype=jnp.float32)
    dd, id_ = knn(q4, s4, neighbors=K4, farthest=False)
    jax.block_until_ready((dd, id_))
    dd_ref, id_ref = _knn_ref(q4, s4, K4, farthest=False)
    assert jnp.allclose(dd, dd_ref, atol=1e-4), "distance mismatch (D / MXU)"
    assert jnp.array_equal(id_, id_ref), "index mismatch (D / MXU)"

    print("KERNEL_OK")
</pallas_src>

<mosaic_0001>
module attributes {stable_mosaic.version = 11 : i64} {
  func.func @_knn_kernel(%arg0: i32, %arg1: i32, %arg2: i32, %arg3: memref<1x16x4xf32, #tpu.memory_space<vmem>>, %arg4: memref<1x4x128xf32, #tpu.memory_space<vmem>>, %arg5: memref<1x16x8xf32, #tpu.memory_space<vmem>>, %arg6: memref<1x16x8xi32, #tpu.memory_space<vmem>>, %arg7: memref<16x8xf32, #tpu.memory_space<vmem>>, %arg8: memref<16x8xi32, #tpu.memory_space<vmem>>) attributes {dimension_semantics = [#tpu.dimension_semantics<parallel>, #tpu.dimension_semantics<parallel>, #tpu.dimension_semantics<arbitrary>], iteration_bounds = array<i64: 2, 1, 1>, scalar_prefetch = 0 : i64, scratch_operands = 2 : i64, tpu.core_type = #tpu.core_type<tc>, window_params = [{transform_indices = @transform_0, window_bounds = array<i64: 1, 16, 4>}, {transform_indices = @transform_1, window_bounds = array<i64: 1, 4, 128>}, {transform_indices = @transform_2, window_bounds = array<i64: 1, 16, 8>}, {transform_indices = @transform_3, window_bounds = array<i64: 1, 16, 8>}]} {
    %c0_i32 = arith.constant 0 : i32
    %0 = arith.cmpi eq, %arg2, %c0_i32 : i32
    %1 = arith.extui %0 : i1 to i32
    %cst = arith.constant 0x7F800000 : f32
    %c0_i32_0 = arith.constant 0 : i32
    %2 = arith.cmpi ne, %1, %c0_i32_0 : i32
    scf.if %2 {
      %279 = vector.broadcast %cst : f32 to vector<16x8xf32>
      %c0_80 = arith.constant 0 : index
      %c0_81 = arith.constant 0 : index
      %280 = vector.load %arg7[%c0_80, %c0_81] : memref<16x8xf32, #tpu.memory_space<vmem>>, vector<16x8xf32>
      tpu.vector_store %arg7[%c0_80, %c0_81], %279 {strides = array<i32>} : memref<16x8xf32, #tpu.memory_space<vmem>>, vector<16x8xf32>,
      %c24_i32_82 = arith.constant 24 : i32
      %281 = vector.broadcast %c24_i32_82 : i32 to vector<16x8xi32>
      %c0_83 = arith.constant 0 : index
      %c0_84 = arith.constant 0 : index
      %282 = vector.load %arg8[%c0_83, %c0_84] : memref<16x8xi32, #tpu.memory_space<vmem>>, vector<16x8xi32>
      tpu.vector_store %arg8[%c0_83, %c0_84], %281 {strides = array<i32>} : memref<16x8xi32, #tpu.memory_space<vmem>>, vector<16x8xi32>,
    } else {
    }
    %c0 = arith.constant 0 : index
    %c0_1 = arith.constant 0 : index
    %c0_2 = arith.constant 0 : index
    %3 = vector.load %arg3[%c0, %c0_1, %c0_2] : memref<1x16x4xf32, #tpu.memory_space<vmem>>, vector<1x16x4xf32>
    %4 = vector.shape_cast %3 : vector<1x16x4xf32> to vector<16x4xf32>
    %c128_i32 = arith.constant 128 : i32
    %5 = arith.muli %arg2, %c128_i32 : i32
    %c0_3 = arith.constant 0 : index
    %c0_4 = arith.constant 0 : index
    %c0_5 = arith.constant 0 : index
    %6 = vector.load %arg4[%c0_3, %c0_4, %c0_5] : memref<1x4x128xf32, #tpu.memory_space<vmem>>, vector<1x4x128xf32>
    %7 = vector.shape_cast %6 : vector<1x4x128xf32> to vector<4x128xf32>
    %cst_6 = arith.constant 0.000000e+00 : f32
    %8 = vector.broadcast %cst_6 : f32 to vector<16x128xf32>
    %9 = vector.extract_strided_slice %4 {offsets = [0, 0], sizes = [16, 1], strides = [1, 1]} : vector<16x4xf32> to vector<16x1xf32>
    %10 = vector.extract_strided_slice %7 {offsets = [0, 0], sizes = [1, 128], strides = [1, 1]} : vector<4x128xf32> to vector<1x128xf32>
    %11 = vector.broadcast %9 : vector<16x1xf32> to vector<16x128xf32>
    %12 = vector.broadcast %10 : vector<1x128xf32> to vector<16x128xf32>
    %13 = arith.subf %11, %12 : vector<16x128xf32>
    %14 = arith.mulf %13, %13 : vector<16x128xf32>
    %15 = arith.addf %8, %14 : vector<16x128xf32>
    %16 = vector.extract_strided_slice %4 {offsets = [0, 1], sizes = [16, 1], strides = [1, 1]} : vector<16x4xf32> to vector<16x1xf32>
    %17 = vector.extract_strided_slice %7 {offsets = [1, 0], sizes = [1, 128], strides = [1, 1]} : vector<4x128xf32> to vector<1x128xf32>
    %18 = vector.broadcast %16 : vector<16x1xf32> to vector<16x128xf32>
    %19 = vector.broadcast %17 : vector<1x128xf32> to vector<16x128xf32>
    %20 = arith.subf %18, %19 : vector<16x128xf32>
    %21 = arith.mulf %20, %20 : vector<16x128xf32>
    %22 = arith.addf %15, %21 : vector<16x128xf32>
    %23 = vector.extract_strided_slice %4 {offsets = [0, 2], sizes = [16, 1], strides = [1, 1]} : vector<16x4xf32> to vector<16x1xf32>
    %24 = vector.extract_strided_slice %7 {offsets = [2, 0], sizes = [1, 128], strides = [1, 1]} : vector<4x128xf32> to vector<1x128xf32>
    %25 = vector.broadcast %23 : vector<16x1xf32> to vector<16x128xf32>
    %26 = vector.broadcast %24 : vector<1x128xf32> to vector<16x128xf32>
    %27 = arith.subf %25, %26 : vector<16x128xf32>
    %28 = arith.mulf %27, %27 : vector<16x128xf32>
    %29 = arith.addf %22, %28 : vector<16x128xf32>
    %30 = vector.extract_strided_slice %4 {offsets = [0, 3], sizes = [16, 1], strides = [1, 1]} : vector<16x4xf32> to vector<16x1xf32>
    %31 = vector.extract_strided_slice %7 {offsets = [3, 0], sizes = [1, 128], strides = [1, 1]} : vector<4x128xf32> to vector<1x128xf32>
    %32 = vector.broadcast %30 : vector<16x1xf32> to vector<16x128xf32>
    %33 = vector.broadcast %31 : vector<1x128xf32> to vector<16x128xf32>
    %34 = arith.subf %32, %33 : vector<16x128xf32>
    %35 = arith.mulf %34, %34 : vector<16x128xf32>
    %36 = arith.addf %29, %35 : vector<16x128xf32>
    %c0_i32_7 = arith.constant 0 : i32
    %37 = arith.addi %5, %c0_i32_7 : i32
    %38 = tpu.iota {dimensions = array<i32: 1>} : vector<1x128xi32>
    %39 = vector.broadcast %37 : i32 to vector<1x128xi32>
    %40 = arith.addi %39, %38 : vector<1x128xi32>
    %c24_i32 = arith.constant 24 : i32
    %41 = vector.broadcast %c24_i32 : i32 to vector<1x128xi32>
    %42 = arith.cmpi slt, %40, %41 : vector<1x128xi32>
    %cst_8 = arith.constant 0x7F800000 : f32
    %43 = vector.shape_cast %42 : vector<1x128xi1> to vector<1x128xi1>
    %44 = vector.broadcast %43 : vector<1x128xi1> to vector<16x128xi1>
    %45 = vector.broadcast %cst_8 : f32 to vector<16x128xf32>
    %46 = arith.select %44, %36, %45 : vector<16x128xi1>, vector<16x128xf32>
    %c0_9 = arith.constant 0 : index
    %c0_10 = arith.constant 0 : index
    %47 = vector.load %arg7[%c0_9, %c0_10] : memref<16x8xf32, #tpu.memory_space<vmem>>, vector<16x8xf32>
    %c0_11 = arith.constant 0 : index
    %c0_12 = arith.constant 0 : index
    %48 = vector.load %arg8[%c0_11, %c0_12] : memref<16x8xi32, #tpu.memory_space<vmem>>, vector<16x8xi32>
    %cst_13 = arith.constant dense<0x7F800000> : vector<16xf32>
    %49 = vector.multi_reduction <minimumf>, %46, %cst_13 [1] : vector<16x128xf32> to vector<16xf32>
    %50 = vector.shape_cast %49 : vector<16xf32> to vector<16x1xf32>
    %cst_14 = arith.constant dense<0x7F800000> : vector<16xf32>
    %51 = vector.multi_reduction <minimumf>, %47, %cst_14 [1] : vector<16x8xf32> to vector<16xf32>
    %52 = vector.shape_cast %51 : vector<16xf32> to vector<16x1xf32>
    %53 = arith.minimumf %50, %52 : vector<16x1xf32>
    %54 = vector.broadcast %53 : vector<16x1xf32> to vector<16x128xf32>
    %55 = arith.cmpf oeq, %46, %54 : vector<16x128xf32>
    %c2147483647_i32 = arith.constant 2147483647 : i32
    %56 = vector.shape_cast %40 : vector<1x128xi32> to vector<1x128xi32>
    %57 = vector.broadcast %56 : vector<1x128xi32> to vector<16x128xi32>
    %58 = vector.broadcast %c2147483647_i32 : i32 to vector<16x128xi32>
    %59 = arith.select %55, %57, %58 : vector<16x128xi1>, vector<16x128xi32>
    %cst_15 = arith.constant dense<2147483647> : vector<16xi32>
    %60 = vector.multi_reduction <minsi>, %59, %cst_15 [1] : vector<16x128xi32> to vector<16xi32>
    %61 = vector.shape_cast %60 : vector<16xi32> to vector<16x1xi32>
    %62 = vector.broadcast %53 : vector<16x1xf32> to vector<16x8xf32>
    %63 = arith.cmpf oeq, %47, %62 : vector<16x8xf32>
    %c2147483647_i32_16 = arith.constant 2147483647 : i32
    %64 = vector.broadcast %c2147483647_i32_16 : i32 to vector<16x8xi32>
    %65 = arith.select %63, %48, %64 : vector<16x8xi1>, vector<16x8xi32>
    %cst_17 = arith.constant dense<2147483647> : vector<16xi32>
    %66 = vector.multi_reduction <minsi>, %65, %cst_17 [1] : vector<16x8xi32> to vector<16xi32>
    %67 = vector.shape_cast %66 : vector<16xi32> to vector<16x1xi32>
    %68 = arith.minsi %61, %67 : vector<16x1xi32>
    %69 = vector.broadcast %40 : vector<1x128xi32> to vector<16x128xi32>
    %70 = vector.broadcast %68 : vector<16x1xi32> to vector<16x128xi32>
    %71 = arith.cmpi eq, %69, %70 : vector<16x128xi32>
    %cst_18 = arith.constant 0x7F800000 : f32
    %72 = vector.broadcast %cst_18 : f32 to vector<16x128xf32>
    %73 = arith.select %71, %72, %46 : vector<16x128xi1>, vector<16x128xf32>
    %74 = vector.broadcast %68 : vector<16x1xi32> to vector<16x8xi32>
    %75 = arith.cmpi eq, %48, %74 : vector<16x8xi32>
    %cst_19 = arith.constant 0x7F800000 : f32
    %76 = vector.broadcast %cst_19 : f32 to vector<16x8xf32>
    %77 = arith.select %75, %76, %47 : vector<16x8xi1>, vector<16x8xf32>
    %cst_20 = arith.constant dense<0x7F800000> : vector<16xf32>
    %78 = vector.multi_reduction <minimumf>, %73, %cst_20 [1] : vector<16x128xf32> to vector<16xf32>
    %79 = vector.shape_cast %78 : vector<16xf32> to vector<16x1xf32>
    %cst_21 = arith.constant dense<0x7F800000> : vector<16xf32>
    %80 = vector.multi_reduction <minimumf>, %77, %cst_21 [1] : vector<16x8xf32> to vector<16xf32>
    %81 = vector.shape_cast %80 : vector<16xf32> to vector<16x1xf32>
    %82 = arith.minimumf %79, %81 : vector<16x1xf32>
    %83 = vector.broadcast %82 : vector<16x1xf32> to vector<16x128xf32>
    %84 = arith.cmpf oeq, %73, %83 : vector<16x128xf32>
    %c2147483647_i32_22 = arith.constant 2147483647 : i32
    %85 = vector.shape_cast %40 : vector<1x128xi32> to vector<1x128xi32>
    %86 = vector.broadcast %85 : vector<1x128xi32> to vector<16x128xi32>
    %87 = vector.broadcast %c2147483647_i32_22 : i32 to vector<16x128xi32>
    %88 = arith.select %84, %86, %87 : vector<16x128xi1>, vector<16x128xi32>
    %cst_23 = arith.constant dense<2147483647> : vector<16xi32>
    %89 = vector.multi_reduction <minsi>, %88, %cst_23 [1] : vector<16x128xi32> to vector<16xi32>
    %90 = vector.shape_cast %89 : vector<16xi32> to vector<16x1xi32>
    %91 = vector.broadcast %82 : vector<16x1xf32> to vector<16x8xf32>
    %92 = arith.cmpf oeq, %77, %91 : vector<16x8xf32>
    %c2147483647_i32_24 = arith.constant 2147483647 : i32
    %93 = vector.broadcast %c2147483647_i32_24 : i32 to vector<16x8xi32>
    %94 = arith.select %92, %48, %93 : vector<16x8xi1>, vector<16x8xi32>
    %cst_25 = arith.constant dense<2147483647> : vector<16xi32>
    %95 = vector.multi_reduction <minsi>, %94, %cst_25 [1] : vector<16x8xi32> to vector<16xi32>
    %96 = vector.shape_cast %95 : vector<16xi32> to vector<16x1xi32>
    %97 = arith.minsi %90, %96 : vector<16x1xi32>
    %98 = vector.broadcast %40 : vector<1x128xi32> to vector<16x128xi32>
    %99 = vector.broadcast %97 : vector<16x1xi32> to vector<16x128xi32>
    %100 = arith.cmpi eq, %98, %99 : vector<16x128xi32>
    %cst_26 = arith.constant 0x7F800000 : f32
    %101 = vector.broadcast %cst_26 : f32 to vector<16x128xf32>
    %102 = arith.select %100, %101, %73 : vector<16x128xi1>, vector<16x128xf32>
    %103 = vector.broadcast %97 : vector<16x1xi32> to vector<16x8xi32>
    %104 = arith.cmpi eq, %48, %103 : vector<16x8xi32>
    %cst_27 = arith.constant 0x7F800000 : f32
    %105 = vector.broadcast %cst_27 : f32 to vector<16x8xf32>
    %106 = arith.select %104, %105, %77 : vector<16x8xi1>, vector<16x8xf32>
    %cst_28 = arith.constant dense<0x7F800000> : vector<16xf32>
    %107 = vector.multi_reduction <minimumf>, %102, %cst_28 [1] : vector<16x128xf32> to vector<16xf32>
    %108 = vector.shape_cast %107 : vector<16xf32> to vector<16x1xf32>
    %cst_29 = arith.constant dense<0x7F800000> : vector<16xf32>
    %109 = vector.multi_reduction <minimumf>, %106, %cst_29 [1] : vector<16x8xf32> to vector<16xf32>
    %110 = vector.shape_cast %109 : vector<16xf32> to vector<16x1xf32>
    %111 = arith.minimumf %108, %110 : vector<16x1xf32>
    %112 = vector.broadcast %111 : vector<16x1xf32> to vector<16x128xf32>
    %113 = arith.cmpf oeq, %102, %112 : vector<16x128xf32>
    %c2147483647_i32_30 = arith.constant 2147483647 : i32
    %114 = vector.shape_cast %40 : vector<1x128xi32> to vector<1x128xi32>
    %115 = vector.broadcast %114 : vector<1x128xi32> to vector<16x128xi32>
    %116 = vector.broadcast %c2147483647_i32_30 : i32 to vector<16x128xi32>
    %117 = arith.select %113, %115, %116 : vector<16x128xi1>, vector<16x128xi32>
    %cst_31 = arith.constant dense<2147483647> : vector<16xi32>
    %118 = vector.multi_reduction <minsi>, %117, %cst_31 [1] : vector<16x128xi32> to vector<16xi32>
    %119 = vector.shape_cast %118 : vector<16xi32> to vector<16x1xi32>
    %120 = vector.broadcast %111 : vector<16x1xf32> to vector<16x8xf32>
    %121 = arith.cmpf oeq, %106, %120 : vector<16x8xf32>
    %c2147483647_i32_32 = arith.constant 2147483647 : i32
    %122 = vector.broadcast %c2147483647_i32_32 : i32 to vector<16x8xi32>
    %123 = arith.select %121, %48, %122 : vector<16x8xi1>, vector<16x8xi32>
    %cst_33 = arith.constant dense<2147483647> : vector<16xi32>
    %124 = vector.multi_reduction <minsi>, %123, %cst_33 [1] : vector<16x8xi32> to vector<16xi32>
    %125 = vector.shape_cast %124 : vector<16xi32> to vector<16x1xi32>
    %126 = arith.minsi %119, %125 : vector<16x1xi32>
    %127 = vector.broadcast %40 : vector<1x128xi32> to vector<16x128xi32>
    %128 = vector.broadcast %126 : vector<16x1xi32> to vector<16x128xi32>
    %129 = arith.cmpi eq, %127, %128 : vector<16x128xi32>
    %cst_34 = arith.constant 0x7F800000 : f32
    %130 = vector.broadcast %cst_34 : f32 to vector<16x128xf32>
    %131 = arith.select %129, %130, %102 : vector<16x128xi1>, vector<16x128xf32>
    %132 = vector.broadcast %126 : vector<16x1xi32> to vector<16x8xi32>
    %133 = arith.cmpi eq, %48, %132 : vector<16x8xi32>
    %cst_35 = arith.constant 0x7F800000 : f32
    %134 = vector.broadcast %cst_35 : f32 to vector<16x8xf32>
    %135 = arith.select %133, %134, %106 : vector<16x8xi1>, vector<16x8xf32>
    %cst_36 = arith.constant dense<0x7F800000> : vector<16xf32>
    %136 = vector.multi_reduction <minimumf>, %131, %cst_36 [1] : vector<16x128xf32> to vector<16xf32>
    %137 = vector.shape_cast %136 : vector<16xf32> to vector<16x1xf32>
    %cst_37 = arith.constant dense<0x7F800000> : vector<16xf32>
    %138 = vector.multi_reduction <minimumf>, %135, %cst_37 [1] : vector<16x8xf32> to vector<16xf32>
    %139 = vector.shape_cast %138 : vector<16xf32> to vector<16x1xf32>
    %140 = arith.minimumf %137, %139 : vector<16x1xf32>
    %141 = vector.broadcast %140 : vector<16x1xf32> to vector<16x128xf32>
    %142 = arith.cmpf oeq, %131, %141 : vector<16x128xf32>
    %c2147483647_i32_38 = arith.constant 2147483647 : i32
    %143 = vector.shape_cast %40 : vector<1x128xi32> to vector<1x128xi32>
    %144 = vector.broadcast %143 : vector<1x128xi32> to vector<16x128xi32>
    %145 = vector.broadcast %c2147483647_i32_38 : i32 to vector<16x128xi32>
    %146 = arith.select %142, %144, %145 : vector<16x128xi1>, vector<16x128xi32>
    %cst_39 = arith.constant dense<2147483647> : vector<16xi32>
    %147 = vector.multi_reduction <minsi>, %146, %cst_39 [1] : vector<16x128xi32> to vector<16xi32>
    %148 = vector.shape_cast %147 : vector<16xi32> to vector<16x1xi32>
    %149 = vector.broadcast %140 : vector<16x1xf32> to vector<16x8xf32>
    %150 = arith.cmpf oeq, %135, %149 : vector<16x8xf32>
    %c2147483647_i32_40 = arith.constant 2147483647 : i32
    %151 = vector.broadcast %c2147483647_i32_40 : i32 to vector<16x8xi32>
    %152 = arith.select %150, %48, %151 : vector<16x8xi1>, vector<16x8xi32>
    %cst_41 = arith.constant dense<2147483647> : vector<16xi32>
    %153 = vector.multi_reduction <minsi>, %152, %cst_41 [1] : vector<16x8xi32> to vector<16xi32>
    %154 = vector.shape_cast %153 : vector<16xi32> to vector<16x1xi32>
    %155 = arith.minsi %148, %154 : vector<16x1xi32>
    %156 = vector.broadcast %40 : vector<1x128xi32> to vector<16x128xi32>
    %157 = vector.broadcast %155 : vector<16x1xi32> to vector<16x128xi32>
    %158 = arith.cmpi eq, %156, %157 : vector<16x128xi32>
    %cst_42 = arith.constant 0x7F800000 : f32
    %159 = vector.broadcast %cst_42 : f32 to vector<16x128xf32>
    %160 = arith.select %158, %159, %131 : vector<16x128xi1>, vector<16x128xf32>
    %161 = vector.broadcast %155 : vector<16x1xi32> to vector<16x8xi32>
    %162 = arith.cmpi eq, %48, %161 : vector<16x8xi32>
    %cst_43 = arith.constant 0x7F800000 : f32
    %163 = vector.broadcast %cst_43 : f32 to vector<16x8xf32>
    %164 = arith.select %162, %163, %135 : vector<16x8xi1>, vector<16x8xf32>
    %cst_44 = arith.constant dense<0x7F800000> : vector<16xf32>
    %165 = vector.multi_reduction <minimumf>, %160, %cst_44 [1] : vector<16x128xf32> to vector<16xf32>
    %166 = vector.shape_cast %165 : vector<16xf32> to vector<16x1xf32>
    %cst_45 = arith.constant dense<0x7F800000> : vector<16xf32>
    %167 = vector.multi_reduction <minimumf>, %164, %cst_45 [1] : vector<16x8xf32> to vector<16xf32>
    %168 = vector.shape_cast %167 : vector<16xf32> to vector<16x1xf32>
    %169 = arith.minimumf %166, %168 : vector<16x1xf32>
    %170 = vector.broadcast %169 : vector<16x1xf32> to vector<16x128xf32>
    %171 = arith.cmpf oeq, %160, %170 : vector<16x128xf32>
    %c2147483647_i32_46 = arith.constant 2147483647 : i32
    %172 = vector.shape_cast %40 : vector<1x128xi32> to vector<1x128xi32>
    %173 = vector.broadcast %172 : vector<1x128xi32> to vector<16x128xi32>
    %174 = vector.broadcast %c2147483647_i32_46 : i32 to vector<16x128xi32>
    %175 = arith.select %171, %173, %174 : vector<16x128xi1>, vector<16x128xi32>
    %cst_47 = arith.constant dense<2147483647> : vector<16xi32>
    %176 = vector.multi_reduction <minsi>, %175, %cst_47 [1] : vector<16x128xi32> to vector<16xi32>
    %177 = vector.shape_cast %176 : vector<16xi32> to vector<16x1xi32>
    %178 = vector.broadcast %169 : vector<16x1xf32> to vector<16x8xf32>
    %179 = arith.cmpf oeq, %164, %178 : vector<16x8xf32>
    %c2147483647_i32_48 = arith.constant 2147483647 : i32
    %180 = vector.broadcast %c2147483647_i32_48 : i32 to vector<16x8xi32>
    %181 = arith.select %179, %48, %180 : vector<16x8xi1>, vector<16x8xi32>
    %cst_49 = arith.constant dense<2147483647> : vector<16xi32>
    %182 = vector.multi_reduction <minsi>, %181, %cst_49 [1] : vector<16x8xi32> to vector<16xi32>
    %183 = vector.shape_cast %182 : vector<16xi32> to vector<16x1xi32>
    %184 = arith.minsi %177, %183 : vector<16x1xi32>
    %185 = vector.broadcast %40 : vector<1x128xi32> to vector<16x128xi32>
    %186 = vector.broadcast %184 : vector<16x1xi32> to vector<16x128xi32>
    %187 = arith.cmpi eq, %185, %186 : vector<16x128xi32>
    %cst_50 = arith.constant 0x7F800000 : f32
    %188 = vector.broadcast %cst_50 : f32 to vector<16x128xf32>
    %189 = arith.select %187, %188, %160 : vector<16x128xi1>, vector<16x128xf32>
    %190 = vector.broadcast %184 : vector<16x1xi32> to vector<16x8xi32>
    %191 = arith.cmpi eq, %48, %190 : vector<16x8xi32>
    %cst_51 = arith.constant 0x7F800000 : f32
    %192 = vector.broadcast %cst_51 : f32 to vector<16x8xf32>
    %193 = arith.select %191, %192, %164 : vector<16x8xi1>, vector<16x8xf32>
    %cst_52 = arith.constant dense<0x7F800000> : vector<16xf32>
    %194 = vector.multi_reduction <minimumf>, %189, %cst_52 [1] : vector<16x128xf32> to vector<16xf32>
    %195 = vector.shape_cast %194 : vector<16xf32> to vector<16x1xf32>
    %cst_53 = arith.constant dense<0x7F800000> : vector<16xf32>
    %196 = vector.multi_reduction <minimumf>, %193, %cst_53 [1] : vector<16x8xf32> to vector<16xf32>
    %197 = vector.shape_cast %196 : vector<16xf32> to vector<16x1xf32>
    %198 = arith.minimumf %195, %197 : vector<16x1xf32>
    %199 = vector.broadcast %198 : vector<16x1xf32> to vector<16x128xf32>
    %200 = arith.cmpf oeq, %189, %199 : vector<16x128xf32>
    %c2147483647_i32_54 = arith.constant 2147483647 : i32
    %201 = vector.shape_cast %40 : vector<1x128xi32> to vector<1x128xi32>
    %202 = vector.broadcast %201 : vector<1x128xi32> to vector<16x128xi32>
    %203 = vector.broadcast %c2147483647_i32_54 : i32 to vector<16x128xi32>
    %204 = arith.select %200, %202, %203 : vector<16x128xi1>, vector<16x128xi32>
    %cst_55 = arith.constant dense<2147483647> : vector<16xi32>
    %205 = vector.multi_reduction <minsi>, %204, %cst_55 [1] : vector<16x128xi32> to vector<16xi32>
    %206 = vector.shape_cast %205 : vector<16xi32> to vector<16x1xi32>
    %207 = vector.broadcast %198 : vector<16x1xf32> to vector<16x8xf32>
    %208 = arith.cmpf oeq, %193, %207 : vector<16x8xf32>
    %c2147483647_i32_56 = arith.constant 2147483647 : i32
    %209 = vector.broadcast %c2147483647_i32_56 : i32 to vector<16x8xi32>
    %210 = arith.select %208, %48, %209 : vector<16x8xi1>, vector<16x8xi32>
    %cst_57 = arith.constant dense<2147483647> : vector<16xi32>
    %211 = vector.multi_reduction <minsi>, %210, %cst_57 [1] : vector<16x8xi32> to vector<16xi32>
    %212 = vector.shape_cast %211 : vector<16xi32> to vector<16x1xi32>
    %213 = arith.minsi %206, %212 : vector<16x1xi32>
    %214 = vector.broadcast %40 : vector<1x128xi32> to vector<16x128xi32>
    %215 = vector.broadcast %213 : vector<16x1xi32> to vector<16x128xi32>
    %216 = arith.cmpi eq, %214, %215 : vector<16x128xi32>
    %cst_58 = arith.constant 0x7F800000 : f32
    %217 = vector.broadcast %cst_58 : f32 to vector<16x128xf32>
    %218 = arith.select %216, %217, %189 : vector<16x128xi1>, vector<16x128xf32>
    %219 = vector.broadcast %213 : vector<16x1xi32> to vector<16x8xi32>
    %220 = arith.cmpi eq, %48, %219 : vector<16x8xi32>
    %cst_59 = arith.constant 0x7F800000 : f32
    %221 = vector.broadcast %cst_59 : f32 to vector<16x8xf32>
    %222 = arith.select %220, %221, %193 : vector<16x8xi1>, vector<16x8xf32>
    %cst_60 = arith.constant dense<0x7F800000> : vector<16xf32>
    %223 = vector.multi_reduction <minimumf>, %218, %cst_60 [1] : vector<16x128xf32> to vector<16xf32>
    %224 = vector.shape_cast %223 : vector<16xf32> to vector<16x1xf32>
    %cst_61 = arith.constant dense<0x7F800000> : vector<16xf32>
    %225 = vector.multi_reduction <minimumf>, %222, %cst_61 [1] : vector<16x8xf32> to vector<16xf32>
    %226 = vector.shape_cast %225 : vector<16xf32> to vector<16x1xf32>
    %227 = arith.minimumf %224, %226 : vector<16x1xf32>
    %228 = vector.broadcast %227 : vector<16x1xf32> to vector<16x128xf32>
    %229 = arith.cmpf oeq, %218, %228 : vector<16x128xf32>
    %c2147483647_i32_62 = arith.constant 2147483647 : i32
    %230 = vector.shape_cast %40 : vector<1x128xi32> to vector<1x128xi32>
    %231 = vector.broadcast %230 : vector<1x128xi32> to vector<16x128xi32>
    %232 = vector.broadcast %c2147483647_i32_62 : i32 to vector<16x128xi32>
    %233 = arith.select %229, %231, %232 : vector<16x128xi1>, vector<16x128xi32>
    %cst_63 = arith.constant dense<2147483647> : vector<16xi32>
    %234 = vector.multi_reduction <minsi>, %233, %cst_63 [1] : vector<16x128xi32> to vector<16xi32>
    %235 = vector.shape_cast %234 : vector<16xi32> to vector<16x1xi32>
    %236 = vector.broadcast %227 : vector<16x1xf32> to vector<16x8xf32>
    %237 = arith.cmpf oeq, %222, %236 : vector<16x8xf32>
    %c2147483647_i32_64 = arith.constant 2147483647 : i32
    %238 = vector.broadcast %c2147483647_i32_64 : i32 to vector<16x8xi32>
    %239 = arith.select %237, %48, %238 : vector<16x8xi1>, vector<16x8xi32>
    %cst_65 = arith.constant dense<2147483647> : vector<16xi32>
    %240 = vector.multi_reduction <minsi>, %239, %cst_65 [1] : vector<16x8xi32> to vector<16xi32>
    %241 = vector.shape_cast %240 : vector<16xi32> to vector<16x1xi32>
    %242 = arith.minsi %235, %241 : vector<16x1xi32>
    %243 = vector.broadcast %40 : vector<1x128xi32> to vector<16x128xi32>
    %244 = vector.broadcast %242 : vector<16x1xi32> to vector<16x128xi32>
    %245 = arith.cmpi eq, %243, %244 : vector<16x128xi32>
    %cst_66 = arith.constant 0x7F800000 : f32
    %246 = vector.broadcast %cst_66 : f32 to vector<16x128xf32>
    %247 = arith.select %245, %246, %218 : vector<16x128xi1>, vector<16x128xf32>
    %248 = vector.broadcast %242 : vector<16x1xi32> to vector<16x8xi32>
    %249 = arith.cmpi eq, %48, %248 : vector<16x8xi32>
    %cst_67 = arith.constant 0x7F800000 : f32
    %250 = vector.broadcast %cst_67 : f32 to vector<16x8xf32>
    %251 = arith.select %249, %250, %222 : vector<16x8xi1>, vector<16x8xf32>
    %cst_68 = arith.constant dense<0x7F800000> : vector<16xf32>
    %252 = vector.multi_reduction <minimumf>, %247, %cst_68 [1] : vector<16x128xf32> to vector<16xf32>
    %253 = vector.shape_cast %252 : vector<16xf32> to vector<16x1xf32>
    %cst_69 = arith.constant dense<0x7F800000> : vector<16xf32>
    %254 = vector.multi_reduction <minimumf>, %251, %cst_69 [1] : vector<16x8xf32> to vector<16xf32>
    %255 = vector.shape_cast %254 : vector<16xf32> to vector<16x1xf32>
    %256 = arith.minimumf %253, %255 : vector<16x1xf32>
    %257 = vector.broadcast %256 : vector<16x1xf32> to vector<16x128xf32>
    %258 = arith.cmpf oeq, %247, %257 : vector<16x128xf32>
    %c2147483647_i32_70 = arith.constant 2147483647 : i32
    %259 = vector.shape_cast %40 : vector<1x128xi32> to vector<1x128xi32>
    %260 = vector.broadcast %259 : vector<1x128xi32> to vector<16x128xi32>
    %261 = vector.broadcast %c2147483647_i32_70 : i32 to vector<16x128xi32>
    %262 = arith.select %258, %260, %261 : vector<16x128xi1>, vector<16x128xi32>
    %cst_71 = arith.constant dense<2147483647> : vector<16xi32>
    %263 = vector.multi_reduction <minsi>, %262, %cst_71 [1] : vector<16x128xi32> to vector<16xi32>
    %264 = vector.shape_cast %263 : vector<16xi32> to vector<16x1xi32>
    %265 = vector.broadcast %256 : vector<16x1xf32> to vector<16x8xf32>
    %266 = arith.cmpf oeq, %251, %265 : vector<16x8xf32>
    %c2147483647_i32_72 = arith.constant 2147483647 : i32
    %267 = vector.broadcast %c2147483647_i32_72 : i32 to vector<16x8xi32>
    %268 = arith.select %266, %48, %267 : vector<16x8xi1>, vector<16x8xi32>
    %cst_73 = arith.constant dense<2147483647> : vector<16xi32>
    %269 = vector.multi_reduction <minsi>, %268, %cst_73 [1] : vector<16x8xi32> to vector<16xi32>
    %270 = vector.shape_cast %269 : vector<16xi32> to vector<16x1xi32>
    %271 = arith.minsi %264, %270 : vector<16x1xi32>
    %272 = tpu.concatenate %53, %82, %111, %140, %169, %198, %227, %256 in 1 : vector<16x1xf32>, vector<16x1xf32>, vector<16x1xf32>, vector<16x1xf32>, vector<16x1xf32>, vector<16x1xf32>, vector<16x1xf32>, vector<16x1xf32> -> vector<16x8xf32>
    %273 = tpu.concatenate %68, %97, %126, %155, %184, %213, %242, %271 in 1 : vector<16x1xi32>, vector<16x1xi32>, vector<16x1xi32>, vector<16x1xi32>, vector<16x1xi32>, vector<16x1xi32>, vector<16x1xi32>, vector<16x1xi32> -> vector<16x8xi32>
    %c0_74 = arith.constant 0 : index
    %c0_75 = arith.constant 0 : index
    %274 = vector.load %arg7[%c0_74, %c0_75] : memref<16x8xf32, #tpu.memory_space<vmem>>, vector<16x8xf32>
    tpu.vector_store %arg7[%c0_74, %c0_75], %272 {strides = array<i32>} : memref<16x8xf32, #tpu.memory_space<vmem>>, vector<16x8xf32>,
    %c0_76 = arith.constant 0 : index
    %c0_77 = arith.constant 0 : index
    %275 = vector.load %arg8[%c0_76, %c0_77] : memref<16x8xi32, #tpu.memory_space<vmem>>, vector<16x8xi32>
    tpu.vector_store %arg8[%c0_76, %c0_77], %273 {strides = array<i32>} : memref<16x8xi32, #tpu.memory_space<vmem>>, vector<16x8xi32>,
    %c0_i32_78 = arith.constant 0 : i32
    %276 = arith.cmpi eq, %arg2, %c0_i32_78 : i32
    %277 = arith.extui %276 : i1 to i32
    %c0_i32_79 = arith.constant 0 : i32
    %278 = arith.cmpi ne, %277, %c0_i32_79 : i32
    scf.if %278 {
      %c0_80 = arith.constant 0 : index
      %c0_81 = arith.constant 0 : index
      %279 = vector.load %arg7[%c0_80, %c0_81] : memref<16x8xf32, #tpu.memory_space<vmem>>, vector<16x8xf32>
      %280 = math.sqrt %279 : vector<16x8xf32>
      %c0_82 = arith.constant 0 : index
      %c0_83 = arith.constant 0 : index
      %c0_84 = arith.constant 0 : index
      %281 = vector.load %arg5[%c0_82, %c0_83, %c0_84] : memref<1x16x8xf32, #tpu.memory_space<vmem>>, vector<1x16x8xf32>
      %282 = vector.shape_cast %281 : vector<1x16x8xf32> to vector<16x8xf32>
      %283 = vector.shape_cast %280 : vector<16x8xf32> to vector<1x16x8xf32>
      tpu.vector_store %arg5[%c0_82, %c0_83, %c0_84], %283 {strides = array<i32>} : memref<1x16x8xf32, #tpu.memory_space<vmem>>, vector<1x16x8xf32>,
      %c0_85 = arith.constant 0 : index
      %c0_86 = arith.constant 0 : index
      %284 = vector.load %arg8[%c0_85, %c0_86] : memref<16x8xi32, #tpu.memory_space<vmem>>, vector<16x8xi32>
      %c0_87 = arith.constant 0 : index
      %c0_88 = arith.constant 0 : index
      %c0_89 = arith.constant 0 : index
      %285 = vector.load %arg6[%c0_87, %c0_88, %c0_89] : memref<1x16x8xi32, #tpu.memory_space<vmem>>, vector<1x16x8xi32>
      %286 = vector.shape_cast %285 : vector<1x16x8xi32> to vector<16x8xi32>
      %287 = vector.shape_cast %284 : vector<16x8xi32> to vector<1x16x8xi32>
      tpu.vector_store %arg6[%c0_87, %c0_88, %c0_89], %287 {strides = array<i32>} : memref<1x16x8xi32, #tpu.memory_space<vmem>>, vector<1x16x8xi32>,
    } else {
    }
    return
  }
  func.func @transform_0(%arg0: i32, %arg1: i32, %arg2: i32) -> (i32, i32, i32) {
    %c0_i32 = arith.constant 0 : i32
    %c0_i32_0 = arith.constant 0 : i32
    return %arg0, %arg1, %c0_i32 : i32, i32, i32
  }
  func.func @transform_1(%arg0: i32, %arg1: i32, %arg2: i32) -> (i32, i32, i32) {
    %c0_i32 = arith.constant 0 : i32
    %c0_i32_0 = arith.constant 0 : i32
    return %arg0, %c0_i32, %arg2 : i32, i32, i32
  }
  func.func @transform_2(%arg0: i32, %arg1: i32, %arg2: i32) -> (i32, i32, i32) {
    %c0_i32 = arith.constant 0 : i32
    %c0_i32_0 = arith.constant 0 : i32
    return %arg0, %arg1, %c0_i32 : i32, i32, i32
  }
  func.func @transform_3(%arg0: i32, %arg1: i32, %arg2: i32) -> (i32, i32, i32) {
    %c0_i32 = arith.constant 0 : i32
    %c0_i32_0 = arith.constant 0 : i32
    return %arg0, %arg1, %c0_i32 : i32, i32, i32
  }
}

</mosaic_0001>

<llo_original>
// kernel: tpu_custom_call.1
$region0: #{tpu_custom_call.1}
  #allocation0 [shape = 'u32[]', space=smem, size = 0x4, offset = 0x4, fixed_abs, tag = 'smem constant byte address 0x4 - core index']
  #allocation1 [shape = 'u32[72,128]{1,0:T(1,128)}', space=vmem, size = 0x9000, scoped, tag = 'internal scratch']
  #allocation2 [shape = 'f32[16,8]{1,0:T(8,128)}', space=vmem, size = 0x2000, scoped, tag = 'scratch operand']
  #allocation3 [shape = 's32[16,8]{1,0:T(8,128)}', space=vmem, size = 0x2000, scoped, tag = 'scratch operand']
  %s0 = inlined_call_operand.vmem [shape: f32[2,16,4], index: 0, kind: input, shape index: {}]
  %s1 = inlined_call_operand.vmem [shape: f32[2,4,128], index: 1, kind: input, shape index: {}]
  %s2 = inlined_call_operand.vmem [shape: f32[2,16,8], index: 2, kind: output, shape index: {0}]
  %s3 = inlined_call_operand.vmem [shape: s32[2,16,8], index: 3, kind: output, shape index: {1}]
  %4 = xla_tuple %s2, %s3
  %s5 = sld [smem:[#allocation0]]
  $region57: #{tpu_custom_call.1} parent=0
    _
  %s7 = ssub.s32 1, %s5
  %s8 = scalar_select 0, %s7, %s5
  loop: start=0, step=1, limit=4
  $region2: #{tpu_custom_call.1} parent=0 // loop_pre_header
    _
  $region3: #{tpu_custom_call.1} parent=0 // loop_header
    %s10 = sphi 0, %s14
    %p11 = scmp.ge.s32.totalorder %s10, 4
    %s17 = sphi 0, %s36
    %s18 = sphi 0, %s32
    %s19 = sphi 0, %s28
    %s20 = sphi 0, %s17
    %s21 = sphi 0, %s18
    %s22 = sphi 0, %s19
    %s23 = sphi 0, %s20
    %s24 = sphi 0, %s21
    %s25 = sphi 0, %s22
    %s41 = sphi 0, %s43
    %s44 = sphi 0, %s41
    %s45 = sphi 0, %s44
    %s61 = sphi 0, %s45
    %s69 = sphi 0, %s71
    %s72 = sphi 0, %s69
    %s73 = sphi 0, %s72
    %s89 = sphi 0, %s73
    %s97 = sphi 0, %s99
    %s100 = sphi 0, %s97
    %s101 = sphi 0, %s100
    %s117 = sphi 0, %s101
    %s125 = sphi 0, %s127
    %s128 = sphi 0, %s125
    %s129 = sphi 0, %s128
    %s145 = sphi 0, %s129
  $region4: #{tpu_custom_call.1} parent=0 // loop_header_branch
    %13 = sbr.rel (%p11) target = $region8
  $region5: #{tpu_custom_call.1} parent=0 // loop_body
    %s15 = ssub.s32 %s10, 1
    %s16 = ssub.s32 %s10, 2
    %s26 = sadd.s32 1, %s19
    %p27 = scmp.ge.s32.totalorder %s26, 1
    %s28 = scalar_select %p27, 0, %s26
    %s29 = sadd.s32 1, %s18
    %s30 = scalar_select %p27, %s29, %s18
    %p31 = scmp.ge.s32.totalorder %s30, 1
    %s32 = scalar_select %p31, 0, %s30
    %s33 = sadd.s32 1, %s17
    %s34 = scalar_select %p31, %s33, %s17
    %p35 = scmp.ge.s32.totalorder %s34, 2
    %s36 = scalar_select %p35, 0, %s34
    %s37 = ssub.s32 %s17, %s36
    %s38 = ssub.s32 %s18, %s32
    %s39 = sor.u32 %s37, %s38
    %p40 = scmp.eq.s32.totalorder %s39, 0
    %s42 = sadd.s32 %s41, 1
    %s43 = scalar_select %p40, %s41, %s42
    %p46 = pneg %p40
    %p47 = scmp.eq.s32.totalorder %s10, 1
    %p48 = por %p46, %p47
    %p49 = scmp.ne.s32.totalorder %s41, %s44
    %p50 = scmp.eq.s32.totalorder %s10, 0
    %p51 = por %p49, %p50
    %p52 = scmp.ne.s32.totalorder %s41, %s44
    %p53 = scmp.eq.s32.totalorder %s15, 1
    %p54 = por %p52, %p53
    %p55 = scmp.ne.s32.totalorder %s44, %s45
    %p56 = scmp.eq.s32.totalorder %s15, 0
    %p57 = por %p55, %p56
    %p58 = scmp.ne.s32.totalorder %s44, %s45
    %p59 = scmp.eq.s32.totalorder %s16, 1
    %p60 = por %p58, %p59
    %p62 = scmp.ne.s32.totalorder %s45, %s61
    %p63 = scmp.eq.s32.totalorder %s16, 0
    %p64 = por %p62, %p63
    %s65 = ssub.s32 %s17, %s36
    %s66 = ssub.s32 %s19, %s28
    %s67 = sor.u32 %s65, %s66
    %p68 = scmp.eq.s32.totalorder %s67, 0
    %s70 = sadd.s32 %s69, 1
    %s71 = scalar_select %p68, %s69, %s70
    %p74 = pneg %p68
    %p75 = scmp.eq.s32.totalorder %s10, 1
    %p76 = por %p74, %p75
    %p77 = scmp.ne.s32.totalorder %s69, %s72
    %p78 = scmp.eq.s32.totalorder %s10, 0
    %p79 = por %p77, %p78
    %p80 = scmp.ne.s32.totalorder %s69, %s72
    %p81 = scmp.eq.s32.totalorder %s15, 1
    %p82 = por %p80, %p81
    %p83 = scmp.ne.s32.totalorder %s72, %s73
    %p84 = scmp.eq.s32.totalorder %s15, 0
    %p85 = por %p83, %p84
    %p86 = scmp.ne.s32.totalorder %s72, %s73
    %p87 = scmp.eq.s32.totalorder %s16, 1
    %p88 = por %p86, %p87
    %p90 = scmp.ne.s32.totalorder %s73, %s89
    %p91 = scmp.eq.s32.totalorder %s16, 0
    %p92 = por %p90, %p91
    %s93 = ssub.s32 %s17, %s36
    %s94 = ssub.s32 %s18, %s32
    %s95 = sor.u32 %s93, %s94
    %p96 = scmp.eq.s32.totalorder %s95, 0
    %s98 = sadd.s32 %s97, 1
    %s99 = scalar_select %p96, %s97, %s98
    %p102 = pneg %p96
    %p103 = scmp.eq.s32.totalorder %s10, 1
    %p104 = por %p102, %p103
    %p105 = scmp.ne.s32.totalorder %s97, %s100
    %p106 = scmp.eq.s32.totalorder %s10, 0
    %p107 = por %p105, %p106
    %p108 = scmp.ne.s32.totalorder %s97, %s100
    %p109 = scmp.eq.s32.totalorder %s15, 1
    %p110 = por %p108, %p109
    %p111 = scmp.ne.s32.totalorder %s100, %s101
    %p112 = scmp.eq.s32.totalorder %s15, 0
    %p113 = por %p111, %p112
    %p114 = scmp.ne.s32.totalorder %s100, %s101
    %p115 = scmp.eq.s32.totalorder %s16, 1
    %p116 = por %p114, %p115
    %p118 = scmp.ne.s32.totalorder %s101, %s117
    %p119 = scmp.eq.s32.totalorder %s16, 0
    %p120 = por %p118, %p119
    %s121 = ssub.s32 %s17, %s36
    %s122 = ssub.s32 %s18, %s32
    %s123 = sor.u32 %s121, %s122
    %p124 = scmp.eq.s32.totalorder %s123, 0
    %s126 = sadd.s32 %s125, 1
    %s127 = scalar_select %p124, %s125, %s126
    %p130 = pneg %p124
    %p131 = scmp.eq.s32.totalorder %s10, 1
    %p132 = por %p130, %p131
    %p133 = scmp.ne.s32.totalorder %s125, %s128
    %p134 = scmp.eq.s32.totalorder %s10, 0
    %p135 = por %p133, %p134
    %p136 = scmp.ne.s32.totalorder %s125, %s128
    %p137 = scmp.eq.s32.totalorder %s15, 1
    %p138 = por %p136, %p137
    %p139 = scmp.ne.s32.totalorder %s128, %s129
    %p140 = scmp.eq.s32.totalorder %s15, 0
    %p141 = por %p139, %p140
    %p142 = scmp.ne.s32.totalorder %s128, %s129
    %p143 = scmp.eq.s32.totalorder %s16, 1
    %p144 = por %p142, %p143
    %p146 = scmp.ne.s32.totalorder %s129, %s145
    %p147 = scmp.eq.s32.totalorder %s16, 0
    %p148 = por %p146, %p147
    %p149 = scmp.le.s32.totalorder 1, %s10
    %p150 = scmp.lt.s32.totalorder %s10, 3
    %p151 = pnand %p149, %p150
    %p152 = pneg %p151
    // Predicated region
    $region9: #{tpu_custom_call.1} parent=5 // pred_check
      _
    $region10: #{tpu_custom_call.1} parent=5 // pred_check_branch
      %154 = sbr.rel (%p151) target = $region12
    $region11: #{tpu_custom_call.1} parent=5 // pred_region
      %s155 = ssub.s32 %s10, 1
    $region12: #{tpu_custom_call.1} parent=5 // pred_fallthru
      _
    %p156 = scmp.lt.s32.totalorder %s10, 2
    // Predicated region
    $region13: #{tpu_custom_call.1} parent=5 // pred_check
      %p157 = pneg %p156
    $region14: #{tpu_custom_call.1} parent=5 // pred_check_branch
      %159 = sbr.rel (%p157) target = $region16
    $region15: #{tpu_custom_call.1} parent=5 // pred_region
      // Predicated region
      $region17: #{tpu_custom_call.1} parent=15 // pred_check
        %p160 = pneg %p51
      $region18: #{tpu_custom_call.1} parent=15 // pred_check_branch
        %162 = sbr.rel (%p160) target = $region20
      $region19: #{tpu_custom_call.1} parent=15 // pred_region
        %s163 = smul.u32 2, %s18
        %p164 = scmp.lt.s32.totalorder %s17, 1
        %s165 = scalar_select %p164, %s17, 1
        %p166 = scmp.lt.s32.totalorder %s163, 1
        %s167 = scalar_select %p166, %s163, 1
        %s168 = smul.addr %s165, 2
        %s169 = sadd.s32 %s167, %s168
        %s170 = smul.addr %s169, 8
        %s171 = scalar_lea.vmem %s0, %s170
        %s172 = smul.u32 2, %s18
      $region20: #{tpu_custom_call.1} parent=15 // pred_fallthru
        _
      // Predicated region
      $region21: #{tpu_custom_call.1} parent=15 // pred_check
        %p173 = pneg %p79
      $region22: #{tpu_custom_call.1} parent=15 // pred_check_branch
        %175 = sbr.rel (%p173) target = $region24
      $region23: #{tpu_custom_call.1} parent=15 // pred_region
        %p176 = scmp.lt.s32.totalorder %s17, 1
        %s177 = scalar_select %p176, %s17, 1
        %p178 = scmp.lt.s32.totalorder %s19, 0
        %s179 = scalar_select %p178, %s19, 0
        %s180 = sadd.s32 %s179, %s177
        %s181 = smul.addr %s180, 4
        %s182 = scalar_lea.vmem %s1, %s181
      $region24: #{tpu_custom_call.1} parent=15 // pred_fallthru
        _
    $region16: #{tpu_custom_call.1} parent=5 // pred_fallthru
      _
    %p183 = scmp.le.s32.totalorder 1, %s10
    %p184 = scmp.lt.s32.totalorder %s10, 3
    %p185 = pnand %p183, %p184
    %p186 = pneg %p185
    // Predicated region
    $region25: #{tpu_custom_call.1} parent=5 // pred_check
      _
    $region26: #{tpu_custom_call.1} parent=5 // pred_check_branch
      %188 = sbr.rel (%p185) target = $region28
    $region27: #{tpu_custom_call.1} parent=5 // pred_region
      %s189 = ssub.s32 %s10, 1
      %s190 = smul.u32 2, %s21
      %p191 = scmp.lt.s32.totalorder %s20, 1
      %s192 = scalar_select %p191, %s20, 1
      %p193 = scmp.lt.s32.totalorder %s190, 1
      %s194 = scalar_select %p193, %s190, 1
      %s195 = smul.addr %s192, 2
      %s196 = sadd.s32 %s194, %s195
      %s197 = smul.addr %s196, 8
      %s198 = scalar_lea.vmem %s0, %s197
      %p199 = pneg %p57
      %p200 = pneg %p54
      %p201 = scmp.lt.s32.totalorder %s20, 1
      %s202 = scalar_select %p201, %s20, 1
      %p203 = scmp.lt.s32.totalorder %s22, 0
      %s204 = scalar_select %p203, %s22, 0
      %s205 = sadd.s32 %s204, %s202
      %s206 = smul.addr %s205, 4
      %s207 = scalar_lea.vmem %s1, %s206
      %p208 = pneg %p85
      %p209 = pneg %p82
      %p210 = pneg %p113
      %p211 = pneg %p110
      %s212 = smul.u32 2, %s21
      %p213 = scmp.lt.s32.totalorder %s20, 1
      %s214 = scalar_select %p213, %s20, 1
      %p215 = scmp.lt.s32.totalorder %s212, 1
      %s216 = scalar_select %p215, %s212, 1
      %s217 = smul.addr %s214, 2
      %s218 = sadd.s32 %s216, %s217
      %s219 = smul.addr %s218, 8
      %s220 = scalar_lea.vmem %s2, %s219
      %p221 = pneg %p141
      %p222 = pneg %p138
      %s223 = smul.u32 2, %s21
      %p224 = scmp.lt.s32.totalorder %s20, 1
      %s225 = scalar_select %p224, %s20, 1
      %p226 = scmp.lt.s32.totalorder %s223, 1
      %s227 = scalar_select %p226, %s223, 1
      %s228 = smul.addr %s225, 2
      %s229 = sadd.s32 %s227, %s228
      %s230 = smul.addr %s229, 8
      %s231 = scalar_lea.vmem %s3, %s230
      %s232 = smul.u32 2, %s21
      %p233 = scmp.lt.s32.totalorder %s20, 1
      %s234 = scalar_select %p233, %s20, 1
      %p235 = scmp.lt.s32.totalorder %s232, 1
      %s236 = scalar_select %p235, %s232, 1
      %s237 = smul.addr %s234, 2
      %s238 = sadd.s32 %s236, %s237
      %s239 = smul.addr %s238, 8
      %s240 = scalar_lea.vmem %s0, %s239
      %s241 = smul.u32 2, %s21
      %p242 = scmp.lt.s32.totalorder %s20, 1
      %s243 = scalar_select %p242, %s20, 1
      %p244 = scmp.lt.s32.totalorder %s22, 0
      %s245 = scalar_select %p244, %s22, 0
      %s246 = sadd.s32 %s245, %s243
      %s247 = smul.addr %s246, 4
      %s248 = scalar_lea.vmem %s1, %s247
      %s249 = smul.u32 2, %s21
      %p250 = scmp.lt.s32.totalorder %s20, 1
      %s251 = scalar_select %p250, %s20, 1
      %p252 = scmp.lt.s32.totalorder %s249, 1
      %s253 = scalar_select %p252, %s249, 1
      %s254 = smul.addr %s251, 2
      %s255 = sadd.s32 %s253, %s254
      %s256 = smul.addr %s255, 8
      %s257 = scalar_lea.vmem %s2, %s256
      %s258 = smul.u32 2, %s21
      %s259 = smul.u32 2, %s21
      %p260 = scmp.lt.s32.totalorder %s20, 1
      %s261 = scalar_select %p260, %s20, 1
      %p262 = scmp.lt.s32.totalorder %s259, 1
      %s263 = scalar_select %p262, %s259, 1
      %s264 = smul.addr %s261, 2
      %s265 = sadd.s32 %s263, %s264
      %s266 = smul.addr %s265, 8
      %s267 = scalar_lea.vmem %s3, %s266
      %s268 = smul.u32 2, %s21
      %p269 = scmp.eq.s32.totalorder %s22, 0
      // Predicated region
      $region29: #{tpu_custom_call.1} parent=27 // pred_check
        %p270 = pneg %p269
      $region30: #{tpu_custom_call.1} parent=27 // pred_check_branch
        %272 = sbr.rel (%p270) target = $region32
      $region31: #{tpu_custom_call.1} parent=27 // pred_region
        %vm273 = vcmask 64512
        %274 = vst.msk [vmem:[#allocation2] sm:$0xff] %vm273, inf
        %275 = vst.msk [vmem:[#allocation2 + $0x8] sm:$0xff] %vm273, inf
        %276 = vst.msk [vmem:[#allocation3] sm:$0xff] %vm273, 24
        %277 = vst.msk [vmem:[#allocation3 + $0x8] sm:$0xff] %vm273, 24
      $region32: #{tpu_custom_call.1} parent=27 // pred_fallthru
        _
      %v278 = vld [vmem:[%s240] sm:$0xff]
      %v279 = vld [vmem:[%s240 + $0x8] sm:$0xff]
      %s280 = smul.u32 %s22, 128
      %v281 = vld [vmem:[%s248] sm:$0xf]
      %283 = vset.pattern.permute.xlu0 0
      %284 = vperm.xlu0 %283, %v278
      %v285 = vpop.permute.xlu0 %284
      %288 = vset.pattern.permute.xlu0 0
      %289 = vperm.xlu0 %288, %v279
      %v290 = vpop.permute.xlu0 %289
      %v292 = vperm.slane %v281, 0
      %v293 = vsub.f32 %v285, %v292
      %v294 = vsub.f32 %v290, %v292
      %v295 = vmul.f32 %v293, %v293
      %v296 = vmul.f32 %v294, %v294
      %v297 = vadd.f32 %v295, 0.0
      %v298 = vadd.f32 %v296, 0.0
      %299 = vset.pattern.permute.xlu0 1
      %300 = vperm.xlu0 %299, %v278
      %v301 = vpop.permute.xlu0 %300
      %303 = vset.pattern.permute.xlu0 1
      %304 = vperm.xlu0 %303, %v279
      %v305 = vpop.permute.xlu0 %304
      %v307 = vperm.slane %v281, 1
      %v308 = vsub.f32 %v301, %v307
      %v309 = vsub.f32 %v305, %v307
      %v310 = vmul.f32 %v308, %v308
      %v311 = vmul.f32 %v309, %v309
      %v312 = vadd.f32 %v297, %v310
      %v313 = vadd.f32 %v298, %v311
      %314 = vset.pattern.permute.xlu0 2
      %315 = vperm.xlu0 %314, %v278
      %v316 = vpop.permute.xlu0 %315
      %318 = vset.pattern.permute.xlu0 2
      %319 = vperm.xlu0 %318, %v279
      %v320 = vpop.permute.xlu0 %319
      %v322 = vperm.slane %v281, 2
      %v323 = vsub.f32 %v316, %v322
      %v324 = vsub.f32 %v320, %v322
      %v325 = vmul.f32 %v323, %v323
      %v326 = vmul.f32 %v324, %v324
      %v327 = vadd.f32 %v312, %v325
      %v328 = vadd.f32 %v313, %v326
      %329 = vset.pattern.permute.xlu0 3
      %330 = vperm.xlu0 %329, %v278
      %v331 = vpop.permute.xlu0 %330
      %333 = vset.pattern.permute.xlu0 3
      %334 = vperm.xlu0 %333, %v279
      %v335 = vpop.permute.xlu0 %334
      %v337 = vperm.slane %v281, 3
      %v338 = vsub.f32 %v331, %v337
      %v339 = vsub.f32 %v335, %v337
      %v340 = vmul.f32 %v338, %v338
      %v341 = vmul.f32 %v339, %v339
      %v342 = vadd.f32 %v327, %v340
      %v343 = vadd.f32 %v328, %v341
      %v344 = vlaneseq
      %v345 = vand.u32 %v344, 127
      %v346 = vstv %s280
      %v347 = vadd.s32 %v346, %v345
      %vm348 = vcmp.lt.s32.totalorder %v347, 24
      %v349 = vsel %vm348, 1, 0
      %vm350 = vcmp.eq.s32.totalorder %v349, 1
      %v351 = vsel %vm350, %v342, inf
      %v352 = vsel %vm350, %v343, inf
      %v353 = vld [vmem:[#allocation2] sm:$0xff]
      %v354 = vld [vmem:[#allocation2 + $0x8] sm:$0xff]
      %v355 = vld [vmem:[#allocation3] sm:$0xff]
      %v356 = vld [vmem:[#allocation3 + $0x8] sm:$0xff]
      %357 = vmin.xlane.f32.xlu0 %v351
      %v358 = vpop.xlane.xlu0 %357
      %359 = vmin.xlane.f32.xlu0 %v352
      %v360 = vpop.xlane.xlu0 %359
      %vm361 = vcmask 64512
      %v362 = vsel %vm361, %v353, inf
      %363 = vmin.xlane.f32.xlu0 %v362
      %v364 = vpop.xlane.xlu0 %363
      %v365 = vsel %vm361, %v354, inf
      %366 = vmin.xlane.f32.xlu0 %v365
      %v367 = vpop.xlane.xlu0 %366
      %v368 = vmin.f32 %v358, %v364
      %v369 = vmin.f32 %v360, %v367
      %vm370 = vcmp.eq.f32.partialorder %v351, %v368
      %vm371 = vcmp.eq.f32.partialorder %v352, %v369
      %v372 = vsel %vm370, %v347, 2147483647
      %v373 = vsel %vm371, %v347, 2147483647
      %v374 = vand.u32 %v372, 65535
      %v375 = vshra.s32 %v372, 16
      %v376 = vcvt.s32.f32 %v374
      %v377 = vcvt.s32.f32 %v375
      %378 = vmin.xlane.f32.xlu0 %v377
      %v379 = vpop.xlane.xlu0 %378
      %vm380 = vcmp.eq.f32.partialorder %v377, %v379
      %v381 = vsel %vm380, %v376, inf
      %382 = vmin.xlane.f32.xlu0 %v381
      %v383 = vpop.xlane.xlu0 %382
      %v384 = vcvt.f32.s32 %v383
      %v385 = vcvt.f32.s32 %v379
      %v386 = vshll.u32 %v385, 16
      %v387 = vadd.s32 %v386, %v384
      %v388 = vand.u32 %v373, 65535
      %v389 = vshra.s32 %v373, 16
      %v390 = vcvt.s32.f32 %v388
      %v391 = vcvt.s32.f32 %v389
      %392 = vmin.xlane.f32.xlu0 %v391
      %v393 = vpop.xlane.xlu0 %392
      %vm394 = vcmp.eq.f32.partialorder %v391, %v393
      %v395 = vsel %vm394, %v390, inf
      %396 = vmin.xlane.f32.xlu0 %v395
      %v397 = vpop.xlane.xlu0 %396
      %v398 = vcvt.f32.s32 %v397
      %v399 = vcvt.f32.s32 %v393
      %v400 = vshll.u32 %v399, 16
      %v401 = vadd.s32 %v400, %v398
      %vm402 = vcmp.eq.f32.partialorder %v353, %v368
      %vm403 = vcmp.eq.f32.partialorder %v354, %v369
      %v404 = vsel %vm402, %v355, 2147483647
      %v405 = vsel %vm403, %v356, 2147483647
      %v406 = vsel %vm361, %v404, 2147483647
      %v407 = vand.u32 %v406, 65535
      %v408 = vshra.s32 %v406, 16
      %v409 = vcvt.s32.f32 %v407
      %v410 = vcvt.s32.f32 %v408
      %411 = vmin.xlane.f32.xlu0 %v410
      %v412 = vpop.xlane.xlu0 %411
      %vm413 = vcmp.eq.f32.partialorder %v410, %v412
      %v414 = vsel %vm413, %v409, inf
      %415 = vmin.xlane.f32.xlu0 %v414
      %v416 = vpop.xlane.xlu0 %415
      %v417 = vcvt.f32.s32 %v416
      %v418 = vcvt.f32.s32 %v412
      %v419 = vshll.u32 %v418, 16
      %v420 = vadd.s32 %v419, %v417
      %v421 = vsel %vm361, %v405, 2147483647
      %v422 = vand.u32 %v421, 65535
      %v423 = vshra.s32 %v421, 16
      %v424 = vcvt.s32.f32 %v422
      %v425 = vcvt.s32.f32 %v423
      %426 = vmin.xlane.f32.xlu0 %v425
      %v427 = vpop.xlane.xlu0 %426
      %vm428 = vcmp.eq.f32.partialorder %v425, %v427
      %v429 = vsel %vm428, %v424, inf
      %430 = vmin.xlane.f32.xlu0 %v429
      %v431 = vpop.xlane.xlu0 %430
      %v432 = vcvt.f32.s32 %v431
      %v433 = vcvt.f32.s32 %v427
      %v434 = vshll.u32 %v433, 16
      %v435 = vadd.s32 %v434, %v432
      %vm436 = vcmp.lt.s32.totalorder %v387, %v420
      %v437 = vsel %vm436, %v387, %v420
      %vm438 = vcmp.lt.s32.totalorder %v401, %v435
      %v439 = vsel %vm438, %v401, %v435
      %vm440 = vcmp.eq.s32.totalorder %v347, %v437
      %vm441 = vcmp.eq.s32.totalorder %v347, %v439
      %v442 = vsel %vm440, inf, %v351
      %v443 = vsel %vm441, inf, %v352
      %vm444 = vcmp.eq.s32.totalorder %v355, %v437
      %vm445 = vcmp.eq.s32.totalorder %v356, %v439
      %v446 = vsel %vm444, inf, %v353
      %v447 = vsel %vm445, inf, %v354
      %448 = vmin.xlane.f32.xlu0 %v442
      %v449 = vpop.xlane.xlu0 %448
      %450 = vmin.xlane.f32.xlu0 %v443
      %v451 = vpop.xlane.xlu0 %450
      %v452 = vsel %vm361, %v446, inf
      %453 = vmin.xlane.f32.xlu0 %v452
      %v454 = vpop.xlane.xlu0 %453
      %v455 = vsel %vm361, %v447, inf
      %456 = vmin.xlane.f32.xlu0 %v455
      %v457 = vpop.xlane.xlu0 %456
      %v458 = vmin.f32 %v449, %v454
      %v459 = vmin.f32 %v451, %v457
      %vm460 = vcmp.eq.f32.partialorder %v442, %v458
      %vm461 = vcmp.eq.f32.partialorder %v443, %v459
      %v462 = vsel %vm460, %v347, 2147483647
      %v463 = vsel %vm461, %v347, 2147483647
      %v464 = vand.u32 %v462, 65535
      %v465 = vshra.s32 %v462, 16
      %v466 = vcvt.s32.f32 %v464
      %v467 = vcvt.s32.f32 %v465
      %468 = vmin.xlane.f32.xlu0 %v467
      %v469 = vpop.xlane.xlu0 %468
      %vm470 = vcmp.eq.f32.partialorder %v467, %v469
      %v471 = vsel %vm470, %v466, inf
      %472 = vmin.xlane.f32.xlu0 %v471
      %v473 = vpop.xlane.xlu0 %472
      %v474 = vcvt.f32.s32 %v473
      %v475 = vcvt.f32.s32 %v469
      %v476 = vshll.u32 %v475, 16
      %v477 = vadd.s32 %v476, %v474
      %v478 = vand.u32 %v463, 65535
      %v479 = vshra.s32 %v463, 16
      %v480 = vcvt.s32.f32 %v478
      %v481 = vcvt.s32.f32 %v479
      %482 = vmin.xlane.f32.xlu0 %v481
      %v483 = vpop.xlane.xlu0 %482
      %vm484 = vcmp.eq.f32.partialorder %v481, %v483
      %v485 = vsel %vm484, %v480, inf
      %486 = vmin.xlane.f32.xlu0 %v485
      %v487 = vpop.xlane.xlu0 %486
      %v488 = vcvt.f32.s32 %v487
      %v489 = vcvt.f32.s32 %v483
      %v490 = vshll.u32 %v489, 16
      %v491 = vadd.s32 %v490, %v488
      %vm492 = vcmp.eq.f32.partialorder %v446, %v458
      %vm493 = vcmp.eq.f32.partialorder %v447, %v459
      %v494 = vsel %vm492, %v355, 2147483647
      %v495 = vsel %vm493, %v356, 2147483647
      %v496 = vsel %vm361, %v494, 2147483647
      %v497 = vand.u32 %v496, 65535
      %v498 = vshra.s32 %v496, 16
      %v499 = vcvt.s32.f32 %v497
      %v500 = vcvt.s32.f32 %v498
      %501 = vmin.xlane.f32.xlu0 %v500
      %v502 = vpop.xlane.xlu0 %501
      %vm503 = vcmp.eq.f32.partialorder %v500, %v502
      %v504 = vsel %vm503, %v499, inf
      %505 = vmin.xlane.f32.xlu0 %v504
      %v506 = vpop.xlane.xlu0 %505
      %v507 = vcvt.f32.s32 %v506
      %v508 = vcvt.f32.s32 %v502
      %v509 = vshll.u32 %v508, 16
      %v510 = vadd.s32 %v509, %v507
      %v511 = vsel %vm361, %v495, 2147483647
      %v512 = vand.u32 %v511, 65535
      %v513 = vshra.s32 %v511, 16
      %v514 = vcvt.s32.f32 %v512
      %v515 = vcvt.s32.f32 %v513
      %516 = vmin.xlane.f32.xlu0 %v515
      %v517 = vpop.xlane.xlu0 %516
      %vm518 = vcmp.eq.f32.partialorder %v515, %v517
      %v519 = vsel %vm518, %v514, inf
      %520 = vmin.xlane.f32.xlu0 %v519
      %v521 = vpop.xlane.xlu0 %520
      %v522 = vcvt.f32.s32 %v521
      %v523 = vcvt.f32.s32 %v517
      %v524 = vshll.u32 %v523, 16
      %v525 = vadd.s32 %v524, %v522
      %vm526 = vcmp.lt.s32.totalorder %v477, %v510
      %v527 = vsel %vm526, %v477, %v510
      %vm528 = vcmp.lt.s32.totalorder %v491, %v525
      %v529 = vsel %vm528, %v491, %v525
      %vm530 = vcmp.eq.s32.totalorder %v347, %v527
      %vm531 = vcmp.eq.s32.totalorder %v347, %v529
      %v532 = vsel %vm530, inf, %v442
      %v533 = vsel %vm531, inf, %v443
      %vm534 = vcmp.eq.s32.totalorder %v355, %v527
      %vm535 = vcmp.eq.s32.totalorder %v356, %v529
      %v536 = vsel %vm534, inf, %v446
      %v537 = vsel %vm535, inf, %v447
      %538 = vmin.xlane.f32.xlu0 %v532
      %v539 = vpop.xlane.xlu0 %538
      %540 = vmin.xlane.f32.xlu0 %v533
      %v541 = vpop.xlane.xlu0 %540
      %v542 = vsel %vm361, %v536, inf
      %543 = vmin.xlane.f32.xlu0 %v542
      %v544 = vpop.xlane.xlu0 %543
      %v545 = vsel %vm361, %v537, inf
      %546 = vmin.xlane.f32.xlu0 %v545
      %v547 = vpop.xlane.xlu0 %546
      %v548 = vmin.f32 %v539, %v544
      %v549 = vmin.f32 %v541, %v547
      %vm550 = vcmp.eq.f32.partialorder %v532, %v548
      %vm551 = vcmp.eq.f32.partialorder %v533, %v549
      %v552 = vsel %vm550, %v347, 2147483647
      %v553 = vsel %vm551, %v347, 2147483647
      %v554 = vand.u32 %v552, 65535
      %v555 = vshra.s32 %v552, 16
      %v556 = vcvt.s32.f32 %v554
      %v557 = vcvt.s32.f32 %v555
      %558 = vmin.xlane.f32.xlu0 %v557
      %v559 = vpop.xlane.xlu0 %558
      %vm560 = vcmp.eq.f32.partialorder %v557, %v559
      %v561 = vsel %vm560, %v556, inf
      %562 = vmin.xlane.f32.xlu0 %v561
      %v563 = vpop.xlane.xlu0 %562
      %v564 = vcvt.f32.s32 %v563
      %v565 = vcvt.f32.s32 %v559
      %v566 = vshll.u32 %v565, 16
      %v567 = vadd.s32 %v566, %v564
      %v568 = vand.u32 %v553, 65535
      %v569 = vshra.s32 %v553, 16
      %v570 = vcvt.s32.f32 %v568
      %v571 = vcvt.s32.f32 %v569
      %572 = vmin.xlane.f32.xlu0 %v571
      %v573 = vpop.xlane.xlu0 %572
      %vm574 = vcmp.eq.f32.partialorder %v571, %v573
      %v575 = vsel %vm574, %v570, inf
      %576 = vmin.xlane.f32.xlu0 %v575
      %v577 = vpop.xlane.xlu0 %576
      %v578 = vcvt.f32.s32 %v577
      %v579 = vcvt.f32.s32 %v573
      %v580 = vshll.u32 %v579, 16
      %v581 = vadd.s32 %v580, %v578
      %vm582 = vcmp.eq.f32.partialorder %v536, %v548
      %vm583 = vcmp.eq.f32.partialorder %v537, %v549
      %v584 = vsel %vm582, %v355, 2147483647
      %v585 = vsel %vm583, %v356, 2147483647
      %v586 = vsel %vm361, %v584, 2147483647
      %v587 = vand.u32 %v586, 65535
      %v588 = vshra.s32 %v586, 16
      %v589 = vcvt.s32.f32 %v587
      %v590 = vcvt.s32.f32 %v588
      %591 = vmin.xlane.f32.xlu0 %v590
      %v592 = vpop.xlane.xlu0 %591
      %vm593 = vcmp.eq.f32.partialorder %v590, %v592
      %v594 = vsel %vm593, %v589, inf
      %595 = vmin.xlane.f32.xlu0 %v594
      %v596 = vpop.xlane.xlu0 %595
      %v597 = vcvt.f32.s32 %v596
      %v598 = vcvt.f32.s32 %v592
      %v599 = vshll.u32 %v598, 16
      %v600 = vadd.s32 %v599, %v597
      %v601 = vsel %vm361, %v585, 2147483647
      %v602 = vand.u32 %v601, 65535
      %v603 = vshra.s32 %v601, 16
      %v604 = vcvt.s32.f32 %v602
      %v605 = vcvt.s32.f32 %v603
      %606 = vmin.xlane.f32.xlu0 %v605
      %v607 = vpop.xlane.xlu0 %606
      %vm608 = vcmp.eq.f32.partialorder %v605, %v607
      %v609 = vsel %vm608, %v604, inf
      %610 = vmin.xlane.f32.xlu0 %v609
      %v611 = vpop.xlane.xlu0 %610
      %v612 = vcvt.f32.s32 %v611
      %v613 = vcvt.f32.s32 %v607
      %v614 = vshll.u32 %v613, 16
      %v615 = vadd.s32 %v614, %v612
      %vm616 = vcmp.lt.s32.totalorder %v567, %v600
      %v617 = vsel %vm616, %v567, %v600
      %vm618 = vcmp.lt.s32.totalorder %v581, %v615
      %v619 = vsel %vm618, %v581, %v615
      %vm620 = vcmp.eq.s32.totalorder %v347, %v617
      %vm621 = vcmp.eq.s32.totalorder %v347, %v619
      %v622 = vsel %vm620, inf, %v532
      %v623 = vsel %vm621, inf, %v533
      %vm624 = vcmp.eq.s32.totalorder %v355, %v617
      %vm625 = vcmp.eq.s32.totalorder %v356, %v619
      %v626 = vsel %vm624, inf, %v536
      %v627 = vsel %vm625, inf, %v537
      %628 = vmin.xlane.f32.xlu0 %v622
      %v629 = vpop.xlane.xlu0 %628
      %630 = vmin.xlane.f32.xlu0 %v623
      %v631 = vpop.xlane.xlu0 %630
      %v632 = vsel %vm361, %v626, inf
      %633 = vmin.xlane.f32.xlu0 %v632
      %v634 = vpop.xlane.xlu0 %633
      %v635 = vsel %vm361, %v627, inf
      %636 = vmin.xlane.f32.xlu0 %v635
      %v637 = vpop.xlane.xlu0 %636
      %v638 = vmin.f32 %v629, %v634
      %v639 = vmin.f32 %v631, %v637
      %vm640 = vcmp.eq.f32.partialorder %v622, %v638
      %vm641 = vcmp.eq.f32.partialorder %v623, %v639
      %v642 = vsel %vm640, %v347, 2147483647
      %v643 = vsel %vm641, %v347, 2147483647
      %v644 = vand.u32 %v642, 65535
      %v645 = vshra.s32 %v642, 16
      %v646 = vcvt.s32.f32 %v644
      %v647 = vcvt.s32.f32 %v645
      %648 = vmin.xlane.f32.xlu0 %v647
      %v649 = vpop.xlane.xlu0 %648
      %vm650 = vcmp.eq.f32.partialorder %v647, %v649
      %v651 = vsel %vm650, %v646, inf
      %652 = vmin.xlane.f32.xlu0 %v651
      %v653 = vpop.xlane.xlu0 %652
      %v654 = vcvt.f32.s32 %v653
      %v655 = vcvt.f32.s32 %v649
      %v656 = vshll.u32 %v655, 16
      %v657 = vadd.s32 %v656, %v654
      %v658 = vand.u32 %v643, 65535
      %v659 = vshra.s32 %v643, 16
      %v660 = vcvt.s32.f32 %v658
      %v661 = vcvt.s32.f32 %v659
      %662 = vmin.xlane.f32.xlu0 %v661
      %v663 = vpop.xlane.xlu0 %662
      %vm664 = vcmp.eq.f32.partialorder %v661, %v663
      %v665 = vsel %vm664, %v660, inf
      %666 = vmin.xlane.f32.xlu0 %v665
      %v667 = vpop.xlane.xlu0 %666
      %v668 = vcvt.f32.s32 %v667
      %v669 = vcvt.f32.s32 %v663
      %v670 = vshll.u32 %v669, 16
      %v671 = vadd.s32 %v670, %v668
      %vm672 = vcmp.eq.f32.partialorder %v626, %v638
      %vm673 = vcmp.eq.f32.partialorder %v627, %v639
      %v674 = vsel %vm672, %v355, 2147483647
      %v675 = vsel %vm673, %v356, 2147483647
      %v676 = vsel %vm361, %v674, 2147483647
      %v677 = vand.u32 %v676, 65535
      %v678 = vshra.s32 %v676, 16
      %v679 = vcvt.s32.f32 %v677
      %v680 = vcvt.s32.f32 %v678
      %681 = vmin.xlane.f32.xlu0 %v680
      %v682 = vpop.xlane.xlu0 %681
      %vm683 = vcmp.eq.f32.partialorder %v680, %v682
      %v684 = vsel %vm683, %v679, inf
      %685 = vmin.xlane.f32.xlu0 %v684
      %v686 = vpop.xlane.xlu0 %685
      %v687 = vcvt.f32.s32 %v686
      %v688 = vcvt.f32.s32 %v682
      %v689 = vshll.u32 %v688, 16
      %v690 = vadd.s32 %v689, %v687
      %v691 = vsel %vm361, %v675, 2147483647
      %v692 = vand.u32 %v691, 65535
      %v693 = vshra.s32 %v691, 16
      %v694 = vcvt.s32.f32 %v692
      %v695 = vcvt.s32.f32 %v693
      %696 = vmin.xlane.f32.xlu0 %v695
      %v697 = vpop.xlane.xlu0 %696
      %vm698 = vcmp.eq.f32.partialorder %v695, %v697
      %v699 = vsel %vm698, %v694, inf
      %700 = vmin.xlane.f32.xlu0 %v699
      %v701 = vpop.xlane.xlu0 %700
      %v702 = vcvt.f32.s32 %v701
      %v703 = vcvt.f32.s32 %v697
      %v704 = vshll.u32 %v703, 16
      %v705 = vadd.s32 %v704, %v702
      %vm706 = vcmp.lt.s32.totalorder %v657, %v690
      %v707 = vsel %vm706, %v657, %v690
      %vm708 = vcmp.lt.s32.totalorder %v671, %v705
      %v709 = vsel %vm708, %v671, %v705
      %vm710 = vcmp.eq.s32.totalorder %v347, %v707
      %vm711 = vcmp.eq.s32.totalorder %v347, %v709
      %v712 = vsel %vm710, inf, %v622
      %v713 = vsel %vm711, inf, %v623
      %vm714 = vcmp.eq.s32.totalorder %v355, %v707
      %vm715 = vcmp.eq.s32.totalorder %v356, %v709
      %v716 = vsel %vm714, inf, %v626
      %v717 = vsel %vm715, inf, %v627
      %718 = vmin.xlane.f32.xlu0 %v712
      %v719 = vpop.xlane.xlu0 %718
      %720 = vmin.xlane.f32.xlu0 %v713
      %v721 = vpop.xlane.xlu0 %720
      %v722 = vsel %vm361, %v716, inf
      %723 = vmin.xlane.f32.xlu0 %v722
      %v724 = vpop.xlane.xlu0 %723
      %v725 = vsel %vm361, %v717, inf
      %726 = vmin.xlane.f32.xlu0 %v725
      %v727 = vpop.xlane.xlu0 %726
      %v728 = vmin.f32 %v719, %v724
      %v729 = vmin.f32 %v721, %v727
      %vm730 = vcmp.eq.f32.partialorder %v712, %v728
      %vm731 = vcmp.eq.f32.partialorder %v713, %v729
      %v732 = vsel %vm730, %v347, 2147483647
      %v733 = vsel %vm731, %v347, 2147483647
      %v734 = vand.u32 %v732, 65535
      %v735 = vshra.s32 %v732, 16
      %v736 = vcvt.s32.f32 %v734
      %v737 = vcvt.s32.f32 %v735
      %738 = vmin.xlane.f32.xlu0 %v737
      %v739 = vpop.xlane.xlu0 %738
      %vm740 = vcmp.eq.f32.partialorder %v737, %v739
      %v741 = vsel %vm740, %v736, inf
      %742 = vmin.xlane.f32.xlu0 %v741
      %v743 = vpop.xlane.xlu0 %742
      %v744 = vcvt.f32.s32 %v743
      %v745 = vcvt.f32.s32 %v739
      %v746 = vshll.u32 %v745, 16
      %v747 = vadd.s32 %v746, %v744
      %v748 = vand.u32 %v733, 65535
      %v749 = vshra.s32 %v733, 16
      %v750 = vcvt.s32.f32 %v748
      %v751 = vcvt.s32.f32 %v749
      %752 = vmin.xlane.f32.xlu0 %v751
      %v753 = vpop.xlane.xlu0 %752
      %vm754 = vcmp.eq.f32.partialorder %v751, %v753
      %v755 = vsel %vm754, %v750, inf
      %756 = vmin.xlane.f32.xlu0 %v755
      %v757 = vpop.xlane.xlu0 %756
      %v758 = vcvt.f32.s32 %v757
      %v759 = vcvt.f32.s32 %v753
      %v760 = vshll.u32 %v759, 16
      %v761 = vadd.s32 %v760, %v758
      %vm762 = vcmp.eq.f32.partialorder %v716, %v728
      %vm763 = vcmp.eq.f32.partialorder %v717, %v729
      %v764 = vsel %vm762, %v355, 2147483647
      %v765 = vsel %vm763, %v356, 2147483647
      %v766 = vsel %vm361, %v764, 2147483647
      %v767 = vand.u32 %v766, 65535
      %v768 = vshra.s32 %v766, 16
      %v769 = vcvt.s32.f32 %v767
      %v770 = vcvt.s32.f32 %v768
      %771 = vmin.xlane.f32.xlu0 %v770
      %v772 = vpop.xlane.xlu0 %771
      %vm773 = vcmp.eq.f32.partialorder %v770, %v772
      %v774 = vsel %vm773, %v769, inf
      %775 = vmin.xlane.f32.xlu0 %v774
      %v776 = vpop.xlane.xlu0 %775
      %v777 = vcvt.f32.s32 %v776
      %v778 = vcvt.f32.s32 %v772
      %v779 = vshll.u32 %v778, 16
      %v780 = vadd.s32 %v779, %v777
      %v781 = vsel %vm361, %v765, 2147483647
      %v782 = vand.u32 %v781, 65535
      %v783 = vshra.s32 %v781, 16
      %v784 = vcvt.s32.f32 %v782
      %v785 = vcvt.s32.f32 %v783
      %786 = vmin.xlane.f32.xlu0 %v785
      %v787 = vpop.xlane.xlu0 %786
      %vm788 = vcmp.eq.f32.partialorder %v785, %v787
      %v789 = vsel %vm788, %v784, inf
      %790 = vmin.xlane.f32.xlu0 %v789
      %v791 = vpop.xlane.xlu0 %790
      %v792 = vcvt.f32.s32 %v791
      %v793 = vcvt.f32.s32 %v787
      %v794 = vshll.u32 %v793, 16
      %v795 = vadd.s32 %v794, %v792
      %vm796 = vcmp.lt.s32.totalorder %v747, %v780
      %v797 = vsel %vm796, %v747, %v780
      %vm798 = vcmp.lt.s32.totalorder %v761, %v795
      %v799 = vsel %vm798, %v761, %v795
      %vm800 = vcmp.eq.s32.totalorder %v347, %v797
      %vm801 = vcmp.eq.s32.totalorder %v347, %v799
      %v802 = vsel %vm800, inf, %v712
      %v803 = vsel %vm801, inf, %v713
      %vm804 = vcmp.eq.s32.totalorder %v355, %v797
      %vm805 = vcmp.eq.s32.totalorder %v356, %v799
      %v806 = vsel %vm804, inf, %v716
      %v807 = vsel %vm805, inf, %v717
      %808 = vmin.xlane.f32.xlu0 %v802
      %v809 = vpop.xlane.xlu0 %808
      %810 = vmin.xlane.f32.xlu0 %v803
      %v811 = vpop.xlane.xlu0 %810
      %v812 = vsel %vm361, %v806, inf
      %813 = vmin.xlane.f32.xlu0 %v812
      %v814 = vpop.xlane.xlu0 %813
      %v815 = vsel %vm361, %v807, inf
      %816 = vmin.xlane.f32.xlu0 %v815
      %v817 = vpop.xlane.xlu0 %816
      %v818 = vmin.f32 %v809, %v814
      %v819 = vmin.f32 %v811, %v817
      %vm820 = vcmp.eq.f32.partialorder %v802, %v818
      %vm821 = vcmp.eq.f32.partialorder %v803, %v819
      %v822 = vsel %vm820, %v347, 2147483647
      %v823 = vsel %vm821, %v347, 2147483647
      %v824 = vand.u32 %v822, 65535
      %v825 = vshra.s32 %v822, 16
      %v826 = vcvt.s32.f32 %v824
      %v827 = vcvt.s32.f32 %v825
      %828 = vmin.xlane.f32.xlu0 %v827
      %v829 = vpop.xlane.xlu0 %828
      %vm830 = vcmp.eq.f32.partialorder %v827, %v829
      %v831 = vsel %vm830, %v826, inf
      %832 = vmin.xlane.f32.xlu0 %v831
      %v833 = vpop.xlane.xlu0 %832
      %v834 = vcvt.f32.s32 %v833
      %v835 = vcvt.f32.s32 %v829
      %v836 = vshll.u32 %v835, 16
      %v837 = vadd.s32 %v836, %v834
      %v838 = vand.u32 %v823, 65535
      %v839 = vshra.s32 %v823, 16
      %v840 = vcvt.s32.f32 %v838
      %v841 = vcvt.s32.f32 %v839
      %842 = vmin.xlane.f32.xlu0 %v841
      %v843 = vpop.xlane.xlu0 %842
      %vm844 = vcmp.eq.f32.partialorder %v841, %v843
      %v845 = vsel %vm844, %v840, inf
      %846 = vmin.xlane.f32.xlu0 %v845
      %v847 = vpop.xlane.xlu0 %846
      %v848 = vcvt.f32.s32 %v847
      %v849 = vcvt.f32.s32 %v843
      %v850 = vshll.u32 %v849, 16
      %v851 = vadd.s32 %v850, %v848
      %vm852 = vcmp.eq.f32.partialorder %v806, %v818
      %vm853 = vcmp.eq.f32.partialorder %v807, %v819
      %v854 = vsel %vm852, %v355, 2147483647
      %v855 = vsel %vm853, %v356, 2147483647
      %v856 = vsel %vm361, %v854, 2147483647
      %v857 = vand.u32 %v856, 65535
      %v858 = vshra.s32 %v856, 16
      %v859 = vcvt.s32.f32 %v857
      %v860 = vcvt.s32.f32 %v858
      %861 = vmin.xlane.f32.xlu0 %v860
      %v862 = vpop.xlane.xlu0 %861
      %vm863 = vcmp.eq.f32.partialorder %v860, %v862
      %v864 = vsel %vm863, %v859, inf
      %865 = vmin.xlane.f32.xlu0 %v864
      %v866 = vpop.xlane.xlu0 %865
      %v867 = vcvt.f32.s32 %v866
      %v868 = vcvt.f32.s32 %v862
      %v869 = vshll.u32 %v868, 16
      %v870 = vadd.s32 %v869, %v867
      %v871 = vsel %vm361, %v855, 2147483647
      %v872 = vand.u32 %v871, 65535
      %v873 = vshra.s32 %v871, 16
      %v874 = vcvt.s32.f32 %v872
      %v875 = vcvt.s32.f32 %v873
      %876 = vmin.xlane.f32.xlu0 %v875
      %v877 = vpop.xlane.xlu0 %876
      %vm878 = vcmp.eq.f32.partialorder %v875, %v877
      %v879 = vsel %vm878, %v874, inf
      %880 = vmin.xlane.f32.xlu0 %v879
      %v881 = vpop.xlane.xlu0 %880
      %v882 = vcvt.f32.s32 %v881
      %v883 = vcvt.f32.s32 %v877
      %v884 = vshll.u32 %v883, 16
      %v885 = vadd.s32 %v884, %v882
      %vm886 = vcmp.lt.s32.totalorder %v837, %v870
      %v887 = vsel %vm886, %v837, %v870
      %vm888 = vcmp.lt.s32.totalorder %v851, %v885
      %v889 = vsel %vm888, %v851, %v885
      %vm890 = vcmp.eq.s32.totalorder %v347, %v887
      %vm891 = vcmp.eq.s32.totalorder %v347, %v889
      %v892 = vsel %vm890, inf, %v802
      %v893 = vsel %vm891, inf, %v803
      %vm894 = vcmp.eq.s32.totalorder %v355, %v887
      %vm895 = vcmp.eq.s32.totalorder %v356, %v889
      %v896 = vsel %vm894, inf, %v806
      %v897 = vsel %vm895, inf, %v807
      %898 = vmin.xlane.f32.xlu0 %v892
      %v899 = vpop.xlane.xlu0 %898
      %900 = vmin.xlane.f32.xlu0 %v893
      %v901 = vpop.xlane.xlu0 %900
      %v902 = vsel %vm361, %v896, inf
      %903 = vmin.xlane.f32.xlu0 %v902
      %v904 = vpop.xlane.xlu0 %903
      %v905 = vsel %vm361, %v897, inf
      %906 = vmin.xlane.f32.xlu0 %v905
      %v907 = vpop.xlane.xlu0 %906
      %v908 = vmin.f32 %v899, %v904
      %v909 = vmin.f32 %v901, %v907
      %vm910 = vcmp.eq.f32.partialorder %v892, %v908
      %vm911 = vcmp.eq.f32.partialorder %v893, %v909
      %v912 = vsel %vm910, %v347, 2147483647
      %v913 = vsel %vm911, %v347, 2147483647
      %v914 = vand.u32 %v912, 65535
      %v915 = vshra.s32 %v912, 16
      %v916 = vcvt.s32.f32 %v914
      %v917 = vcvt.s32.f32 %v915
      %918 = vmin.xlane.f32.xlu0 %v917
      %v919 = vpop.xlane.xlu0 %918
      %vm920 = vcmp.eq.f32.partialorder %v917, %v919
      %v921 = vsel %vm920, %v916, inf
      %922 = vmin.xlane.f32.xlu0 %v921
      %v923 = vpop.xlane.xlu0 %922
      %v924 = vcvt.f32.s32 %v923
      %v925 = vcvt.f32.s32 %v919
      %v926 = vshll.u32 %v925, 16
      %v927 = vadd.s32 %v926, %v924
      %v928 = vand.u32 %v913, 65535
      %v929 = vshra.s32 %v913, 16
      %v930 = vcvt.s32.f32 %v928
      %v931 = vcvt.s32.f32 %v929
      %932 = vmin.xlane.f32.xlu0 %v931
      %v933 = vpop.xlane.xlu0 %932
      %vm934 = vcmp.eq.f32.partialorder %v931, %v933
      %v935 = vsel %vm934, %v930, inf
      %936 = vmin.xlane.f32.xlu0 %v935
      %v937 = vpop.xlane.xlu0 %936
      %v938 = vcvt.f32.s32 %v937
      %v939 = vcvt.f32.s32 %v933
      %v940 = vshll.u32 %v939, 16
      %v941 = vadd.s32 %v940, %v938
      %vm942 = vcmp.eq.f32.partialorder %v896, %v908
      %vm943 = vcmp.eq.f32.partialorder %v897, %v909
      %v944 = vsel %vm942, %v355, 2147483647
      %v945 = vsel %vm943, %v356, 2147483647
      %v946 = vsel %vm361, %v944, 2147483647
      %v947 = vand.u32 %v946, 65535
      %v948 = vshra.s32 %v946, 16
      %v949 = vcvt.s32.f32 %v947
      %v950 = vcvt.s32.f32 %v948
      %951 = vmin.xlane.f32.xlu0 %v950
      %v952 = vpop.xlane.xlu0 %951
      %vm953 = vcmp.eq.f32.partialorder %v950, %v952
      %v954 = vsel %vm953, %v949, inf
      %955 = vmin.xlane.f32.xlu0 %v954
      %v956 = vpop.xlane.xlu0 %955
      %v957 = vcvt.f32.s32 %v956
      %v958 = vcvt.f32.s32 %v952
      %v959 = vshll.u32 %v958, 16
      %v960 = vadd.s32 %v959, %v957
      %v961 = vsel %vm361, %v945, 2147483647
      %v962 = vand.u32 %v961, 65535
      %v963 = vshra.s32 %v961, 16
      %v964 = vcvt.s32.f32 %v962
      %v965 = vcvt.s32.f32 %v963
      %966 = vmin.xlane.f32.xlu0 %v965
      %v967 = vpop.xlane.xlu0 %966
      %vm968 = vcmp.eq.f32.partialorder %v965, %v967
      %v969 = vsel %vm968, %v964, inf
      %970 = vmin.xlane.f32.xlu0 %v969
      %v971 = vpop.xlane.xlu0 %970
      %v972 = vcvt.f32.s32 %v971
      %v973 = vcvt.f32.s32 %v967
      %v974 = vshll.u32 %v973, 16
      %v975 = vadd.s32 %v974, %v972
      %vm976 = vcmp.lt.s32.totalorder %v927, %v960
      %v977 = vsel %vm976, %v927, %v960
      %vm978 = vcmp.lt.s32.totalorder %v941, %v975
      %v979 = vsel %vm978, %v941, %v975
      %vm980 = vcmp.eq.s32.totalorder %v347, %v977
      %vm981 = vcmp.eq.s32.totalorder %v347, %v979
      %v982 = vsel %vm980, inf, %v892
      %v983 = vsel %vm981, inf, %v893
      %vm984 = vcmp.eq.s32.totalorder %v355, %v977
      %vm985 = vcmp.eq.s32.totalorder %v356, %v979
      %v986 = vsel %vm984, inf, %v896
      %v987 = vsel %vm985, inf, %v897
      %988 = vmin.xlane.f32.xlu0 %v982
      %v989 = vpop.xlane.xlu0 %988
      %990 = vmin.xlane.f32.xlu0 %v983
      %v991 = vpop.xlane.xlu0 %990
      %v992 = vsel %vm361, %v986, inf
      %993 = vmin.xlane.f32.xlu0 %v992
      %v994 = vpop.xlane.xlu0 %993
      %v995 = vsel %vm361, %v987, inf
      %996 = vmin.xlane.f32.xlu0 %v995
      %v997 = vpop.xlane.xlu0 %996
      %v998 = vmin.f32 %v989, %v994
      %v999 = vmin.f32 %v991, %v997
      %vm1000 = vcmp.eq.f32.partialorder %v982, %v998
      %vm1001 = vcmp.eq.f32.partialorder %v983, %v999
      %v1002 = vsel %vm1000, %v347, 2147483647
      %v1003 = vsel %vm1001, %v347, 2147483647
      %v1004 = vand.u32 %v1002, 65535
      %v1005 = vshra.s32 %v1002, 16
      %v1006 = vcvt.s32.f32 %v1004
      %v1007 = vcvt.s32.f32 %v1005
      %1008 = vmin.xlane.f32.xlu0 %v1007
      %v1009 = vpop.xlane.xlu0 %1008
      %vm1010 = vcmp.eq.f32.partialorder %v1007, %v1009
      %v1011 = vsel %vm1010, %v1006, inf
      %1012 = vmin.xlane.f32.xlu0 %v1011
      %v1013 = vpop.xlane.xlu0 %1012
      %v1014 = vcvt.f32.s32 %v1013
      %v1015 = vcvt.f32.s32 %v1009
      %v1016 = vshll.u32 %v1015, 16
      %v1017 = vadd.s32 %v1016, %v1014
      %v1018 = vand.u32 %v1003, 65535
      %v1019 = vshra.s32 %v1003, 16
      %v1020 = vcvt.s32.f32 %v1018
      %v1021 = vcvt.s32.f32 %v1019
      %1022 = vmin.xlane.f32.xlu0 %v1021
      %v1023 = vpop.xlane.xlu0 %1022
      %vm1024 = vcmp.eq.f32.partialorder %v1021, %v1023
      %v1025 = vsel %vm1024, %v1020, inf
      %1026 = vmin.xlane.f32.xlu0 %v1025
      %v1027 = vpop.xlane.xlu0 %1026
      %v1028 = vcvt.f32.s32 %v1027
      %v1029 = vcvt.f32.s32 %v1023
      %v1030 = vshll.u32 %v1029, 16
      %v1031 = vadd.s32 %v1030, %v1028
      %vm1032 = vcmp.eq.f32.partialorder %v986, %v998
      %vm1033 = vcmp.eq.f32.partialorder %v987, %v999
      %v1034 = vsel %vm1032, %v355, 2147483647
      %v1035 = vsel %vm1033, %v356, 2147483647
      %v1036 = vsel %vm361, %v1034, 2147483647
      %v1037 = vand.u32 %v1036, 65535
      %v1038 = vshra.s32 %v1036, 16
      %v1039 = vcvt.s32.f32 %v1037
      %v1040 = vcvt.s32.f32 %v1038
      %1041 = vmin.xlane.f32.xlu0 %v1040
      %v1042 = vpop.xlane.xlu0 %1041
      %vm1043 = vcmp.eq.f32.partialorder %v1040, %v1042
      %v1044 = vsel %vm1043, %v1039, inf
      %1045 = vmin.xlane.f32.xlu0 %v1044
      %v1046 = vpop.xlane.xlu0 %1045
      %v1047 = vcvt.f32.s32 %v1046
      %v1048 = vcvt.f32.s32 %v1042
      %v1049 = vshll.u32 %v1048, 16
      %v1050 = vadd.s32 %v1049, %v1047
      %v1051 = vsel %vm361, %v1035, 2147483647
      %v1052 = vand.u32 %v1051, 65535
      %v1053 = vshra.s32 %v1051, 16
      %v1054 = vcvt.s32.f32 %v1052
      %v1055 = vcvt.s32.f32 %v1053
      %1056 = vmin.xlane.f32.xlu0 %v1055
      %v1057 = vpop.xlane.xlu0 %1056
      %vm1058 = vcmp.eq.f32.partialorder %v1055, %v1057
      %v1059 = vsel %vm1058, %v1054, inf
      %1060 = vmin.xlane.f32.xlu0 %v1059
      %v1061 = vpop.xlane.xlu0 %1060
      %v1062 = vcvt.f32.s32 %v1061
      %v1063 = vcvt.f32.s32 %v1057
      %v1064 = vshll.u32 %v1063, 16
      %v1065 = vadd.s32 %v1064, %v1062
      %vm1066 = vcmp.lt.s32.totalorder %v1017, %v1050
      %v1067 = vsel %vm1066, %v1017, %v1050
      %vm1068 = vcmp.lt.s32.totalorder %v1031, %v1065
      %v1069 = vsel %vm1068, %v1031, %v1065
      %vm1070 = vcmask 7168
      %v1071 = vsel %vm1070, %v368, %v458
      %v1072 = vsel %vm1070, %v369, %v459
      %vm1073 = vcmask 15360
      %v1074 = vsel %vm1073, %v1071, %v548
      %v1075 = vsel %vm1073, %v1072, %v549
      %vm1076 = vcmask 23552
      %v1077 = vsel %vm1076, %v1074, %v638
      %v1078 = vsel %vm1076, %v1075, %v639
      %vm1079 = vcmask 31744
      %v1080 = vsel %vm1079, %v1077, %v728
      %v1081 = vsel %vm1079, %v1078, %v729
      %vm1082 = vcmask 39936
      %v1083 = vsel %vm1082, %v1080, %v818
      %v1084 = vsel %vm1082, %v1081, %v819
      %vm1085 = vcmask 48128
      %v1086 = vsel %vm1085, %v1083, %v908
      %v1087 = vsel %vm1085, %v1084, %v909
      %vm1088 = vcmask 56320
      %v1089 = vsel %vm1088, %v1086, %v998
      %v1090 = vsel %vm1088, %v1087, %v999
      %v1091 = vsel %vm1070, %v437, %v527
      %v1092 = vsel %vm1070, %v439, %v529
      %v1093 = vsel %vm1073, %v1091, %v617
      %v1094 = vsel %vm1073, %v1092, %v619
      %v1095 = vsel %vm1076, %v1093, %v707
      %v1096 = vsel %vm1076, %v1094, %v709
      %v1097 = vsel %vm1079, %v1095, %v797
      %v1098 = vsel %vm1079, %v1096, %v799
      %v1099 = vsel %vm1082, %v1097, %v887
      %v1100 = vsel %vm1082, %v1098, %v889
      %v1101 = vsel %vm1085, %v1099, %v977
      %v1102 = vsel %vm1085, %v1100, %v979
      %v1103 = vsel %vm1088, %v1101, %v1067
      %v1104 = vsel %vm1088, %v1102, %v1069
      %1105 = vst.msk [vmem:[#allocation2] sm:$0xff] %vm361, %v1089
      %1106 = vst.msk [vmem:[#allocation2 + $0x8] sm:$0xff] %vm361, %v1090
      %1107 = vst.msk [vmem:[#allocation3] sm:$0xff] %vm361, %v1103
      %1108 = vst.msk [vmem:[#allocation3 + $0x8] sm:$0xff] %vm361, %v1104
      // Predicated region
      $region33: #{tpu_custom_call.1} parent=27 // pred_check
        %p1109 = pneg %p269
      $region34: #{tpu_custom_call.1} parent=27 // pred_check_branch
        %1111 = sbr.rel (%p1109) target = $region36
      $region35: #{tpu_custom_call.1} parent=27 // pred_region
        %v1112 = vld [vmem:[#allocation2] sm:$0xff]
        %v1113 = vld [vmem:[#allocation2 + $0x8] sm:$0xff]
        %v1114 = vrsqrt.pop %v1112
        %v1115 = vmul.f32 %v1114, %v1112
        %v1116 = vmul.f32 %v1115, %v1114
        %v1117 = vmul.f32 0.5, %v1116
        %v1118 = vsub.f32 1.5, %v1117
        %v1119 = vmul.f32 %v1114, %v1118
        %v1120 = vmul.f32 %v1112, %v1119
        %vm1121 = vcmp.eq.f32.partialorder %v1112, inf
        %v1122 = vsel %vm1121, %v1112, %v1120
        %vm1123 = vcmp.eq.f32.partialorder %v1112, 0.0
        %v1124 = vand.u32 %v1112, 2147483648
        %v1125 = vsel %vm1123, %v1124, %v1122
        %v1126 = vrsqrt.pop %v1113
        %v1127 = vmul.f32 %v1126, %v1113
        %v1128 = vmul.f32 %v1127, %v1126
        %v1129 = vmul.f32 0.5, %v1128
        %v1130 = vsub.f32 1.5, %v1129
        %v1131 = vmul.f32 %v1126, %v1130
        %v1132 = vmul.f32 %v1113, %v1131
        %vm1133 = vcmp.eq.f32.partialorder %v1113, inf
        %v1134 = vsel %vm1133, %v1113, %v1132
        %vm1135 = vcmp.eq.f32.partialorder %v1113, 0.0
        %v1136 = vand.u32 %v1113, 2147483648
        %v1137 = vsel %vm1135, %v1136, %v1134
        %1138 = vst.msk [vmem:[%s257] sm:$0xff] %vm361, %v1125
        %1139 = vst.msk [vmem:[%s257 + $0x8] sm:$0xff] %vm361, %v1137
        %v1140 = vld [vmem:[#allocation3] sm:$0xff]
        %v1141 = vld [vmem:[#allocation3 + $0x8] sm:$0xff]
        %1142 = vst.msk [vmem:[%s267] sm:$0xff] %vm361, %v1140
        %1143 = vst.msk [vmem:[%s267 + $0x8] sm:$0xff] %vm361, %v1141
      $region36: #{tpu_custom_call.1} parent=27 // pred_fallthru
        _
      %s1144 = smul.u32 2, %s21
      %p1145 = scmp.lt.s32.totalorder %s20, 1
      %s1146 = scalar_select %p1145, %s20, 1
      %p1147 = scmp.lt.s32.totalorder %s1144, 1
      %s1148 = scalar_select %p1147, %s1144, 1
      %s1149 = smul.addr %s1146, 2
      %s1150 = sadd.s32 %s1148, %s1149
      %s1151 = smul.addr %s1150, 8
      %s1152 = scalar_lea.vmem %s2, %s1151
      %s1153 = smul.u32 2, %s21
      %p1154 = scmp.lt.s32.totalorder %s20, 1
      %s1155 = scalar_select %p1154, %s20, 1
      %p1156 = scmp.lt.s32.totalorder %s1153, 1
      %s1157 = scalar_select %p1156, %s1153, 1
      %s1158 = smul.addr %s1155, 2
      %s1159 = sadd.s32 %s1157, %s1158
      %s1160 = smul.addr %s1159, 8
      %s1161 = scalar_lea.vmem %s3, %s1160
      // Predicated region
      $region37: #{tpu_custom_call.1} parent=27 // pred_check
        %p1162 = pneg %p110
      $region38: #{tpu_custom_call.1} parent=27 // pred_check_branch
        %1164 = sbr.rel (%p1162) target = $region40
      $region39: #{tpu_custom_call.1} parent=27 // pred_region
        %s1165 = smul.u32 2, %s21
      $region40: #{tpu_custom_call.1} parent=27 // pred_fallthru
        _
      // Predicated region
      $region41: #{tpu_custom_call.1} parent=27 // pred_check
        %p1166 = pneg %p138
      $region42: #{tpu_custom_call.1} parent=27 // pred_check_branch
        %1168 = sbr.rel (%p1166) target = $region44
      $region43: #{tpu_custom_call.1} parent=27 // pred_region
        %s1169 = smul.u32 2, %s21
      $region44: #{tpu_custom_call.1} parent=27 // pred_fallthru
        _
    $region28: #{tpu_custom_call.1} parent=5 // pred_fallthru
      _
    %p1170 = scmp.le.s32.totalorder 2, %s10
    // Predicated region
    $region45: #{tpu_custom_call.1} parent=5 // pred_check
      %p1171 = pneg %p1170
    $region46: #{tpu_custom_call.1} parent=5 // pred_check_branch
      %1173 = sbr.rel (%p1171) target = $region48
    $region47: #{tpu_custom_call.1} parent=5 // pred_region
      %s1174 = ssub.s32 %s10, 2
      // Predicated region
      $region49: #{tpu_custom_call.1} parent=47 // pred_check
        %p1175 = pneg %p116
      $region50: #{tpu_custom_call.1} parent=47 // pred_check_branch
        %1177 = sbr.rel (%p1175) target = $region52
      $region51: #{tpu_custom_call.1} parent=47 // pred_region
        %s1178 = smul.u32 2, %s24
        %p1179 = scmp.lt.s32.totalorder %s23, 1
        %s1180 = scalar_select %p1179, %s23, 1
        %p1181 = scmp.lt.s32.totalorder %s1178, 1
        %s1182 = scalar_select %p1181, %s1178, 1
        %s1183 = smul.addr %s1180, 2
        %s1184 = sadd.s32 %s1182, %s1183
        %s1185 = smul.addr %s1184, 8
        %s1186 = scalar_lea.vmem %s2, %s1185
      $region52: #{tpu_custom_call.1} parent=47 // pred_fallthru
        _
      // Predicated region
      $region53: #{tpu_custom_call.1} parent=47 // pred_check
        %p1187 = pneg %p144
      $region54: #{tpu_custom_call.1} parent=47 // pred_check_branch
        %1189 = sbr.rel (%p1187) target = $region56
      $region55: #{tpu_custom_call.1} parent=47 // pred_region
        %s1190 = smul.u32 2, %s24
        %p1191 = scmp.lt.s32.totalorder %s23, 1
        %s1192 = scalar_select %p1191, %s23, 1
        %p1193 = scmp.lt.s32.totalorder %s1190, 1
        %s1194 = scalar_select %p1193, %s1190, 1
        %s1195 = smul.addr %s1192, 2
        %s1196 = sadd.s32 %s1194, %s1195
        %s1197 = smul.addr %s1196, 8
        %s1198 = scalar_lea.vmem %s3, %s1197
      $region56: #{tpu_custom_call.1} parent=47 // pred_fallthru
        _
    $region48: #{tpu_custom_call.1} parent=5 // pred_fallthru
      _
  $region6: #{tpu_custom_call.1} parent=0 // loop_footer
    %s14 = sadd.s32 1, %s10
  $region7: #{tpu_custom_call.1} parent=0 // loop_footer_branch
    %9 = sbr.rel target = $region3
  $region8: #{tpu_custom_call.1} parent=0 // loop_exit
    _

</llo_original>
